<compile_context>
chip_gen: v5e
topology: v5e:2x2
jax: 0.10.0
libtpu: 0.0.40
codegen_flags: <defaults>
</compile_context>

<pallas_src>
import jax
import jax.numpy as jnp
import numpy as np
from jax.experimental import pallas as pl
from jax.experimental.pallas import tpu as pltpu

LANE = 128   # TPU lane width (last dim of a vreg)
SUB = 8      # f32 sublane tile (second-to-last dim of a vreg)


def _round_up(x, m):
    return (x + m - 1) // m * m


# ----------------------------------------------------------------------------
# Fused Bottleneck kernel (one batch image per grid step)
# ----------------------------------------------------------------------------
def _bottleneck_kernel(x_ref, w1_ref, b1_ref, w2_ref, b2_ref, w3_ref, b3_ref,
                       o_ref, pad_ref):
    """x_ref / o_ref: (1, H, W, Cp) f32.
    w1: (Cp, Pp) bf16, w2: (9, Pp, Pp) bf16 (taps dh*3+dw, (cin,cout)),
    w3: (Pp, Cp) bf16 -- BN scale pre-folded.  Biases: (1, Pp)/(1, Cp) f32.
    pad_ref: (H+2, 2*SUB+W, Pp) f32 VMEM scratch (zero halo for the 3x3)."""
    _, H, W, Cp = x_ref.shape
    Pp = w1_ref.shape[1]
    HW = H * W
    LEFT = SUB  # interior column start inside the halo scratch (tile-aligned)

    x2d = x_ref[...].reshape(HW, Cp)                       # f32 residual source

    # ---- conv1 (1x1) + folded bn1 + relu (MXU: bf16 in, f32 acc) -----------
    t1 = jnp.dot(x2d.astype(jnp.bfloat16), w1_ref[...],
                 preferred_element_type=jnp.float32)
    t1 = jnp.maximum(t1 + b1_ref[...], 0.0)

    # ---- stage conv1 output into the zero-haloed scratch -------------------
    pad_ref[...] = jnp.zeros_like(pad_ref)                 # halo must be zero
    pad_ref[1:H + 1, LEFT:LEFT + W, :] = t1.reshape(H, W, Pp)

    # ---- conv2 (3x3, stride=1, pad=1) + folded bn2 + relu -------------------
    # 9 accumulated MXU matmuls over shifted windows of the padded activation.
    acc = jnp.zeros((HW, Pp), jnp.float32)
    for dh in range(3):
        for dw in range(3):
            c0 = LEFT - 1 + dw
            patch = pad_ref[dh:dh + H, c0:c0 + W, :].reshape(HW, Pp)
            acc += jnp.dot(patch.astype(jnp.bfloat16), w2_ref[dh * 3 + dw],
                           preferred_element_type=jnp.float32)
    t2 = jnp.maximum(acc + b2_ref[...], 0.0)

    # ---- conv3 (1x1) + folded bn3 + residual add + relu ---------------------
    y = jnp.dot(t2.astype(jnp.bfloat16), w3_ref[...],
                preferred_element_type=jnp.float32)
    y = jnp.maximum(y + b3_ref[...] + x2d, 0.0)            # residual in f32
    o_ref[...] = y.reshape(1, H, W, Cp).astype(o_ref.dtype)


# ----------------------------------------------------------------------------
# Host-side glue: BN folding, lane padding, pallas_call wrapper
# ----------------------------------------------------------------------------
def fold_bn(gamma, beta, mean, var, eps=1e-5):
    scale = gamma / jnp.sqrt(var + eps)
    bias = beta - mean * scale
    return scale, bias


def bottleneck_forward(x_nchw, params):
    """ResNet Bottleneck forward (stride=1, downsample=None). NCHW in/out."""
    # TODO(synk): stride>1 / downsample path not implemented (this module
    # instance uses stride=1, downsample=None, so the residual is x itself).
    x = jnp.transpose(x_nchw, (0, 2, 3, 1))               # NCHW -> NHWC
    N, H, W, Cin = x.shape
    planes = params["w1"].shape[1]
    Cout = 4 * planes
    assert Cin == Cout, "residual path requires inplanes == planes * 4"
    assert W % SUB == 0, "fused kernel assumes W is a multiple of 8"

    Cp = _round_up(Cin, LANE)
    Pp = _round_up(planes, LANE)

    # Fold inference BatchNorm into the conv weights; keep only bias epilogues.
    s1, b1 = fold_bn(*params["bn1"])
    s2, b2 = fold_bn(*params["bn2"])
    s3, b3 = fold_bn(*params["bn3"])
    w1 = params["w1"] * s1[None, :]                        # (Cin, planes)
    w2 = params["w2"] * s2[None, None, None, :]            # (3,3,planes,planes) HWIO
    w3 = params["w3"] * s3[None, :]                        # (planes, 4*planes)

    # Lane-pad channels to 128 and cast weights to bf16 (MXU-native dtype).
    w1p = jnp.zeros((Cp, Pp), jnp.float32).at[:Cin, :planes].set(w1)
    w1p = w1p.astype(jnp.bfloat16)
    w2p = jnp.zeros((9, Pp, Pp), jnp.float32).at[:, :planes, :planes].set(
        w2.reshape(9, planes, planes)).astype(jnp.bfloat16)
    w3p = jnp.zeros((Pp, Cp), jnp.float32).at[:planes, :Cout].set(w3)
    w3p = w3p.astype(jnp.bfloat16)
    b1p = jnp.zeros((1, Pp), jnp.float32).at[0, :planes].set(b1)
    b2p = jnp.zeros((1, Pp), jnp.float32).at[0, :planes].set(b2)
    b3p = jnp.zeros((1, Cp), jnp.float32).at[0, :Cout].set(b3)

    x_p = jnp.pad(x, ((0, 0), (0, 0), (0, 0), (0, Cp - Cin)))   # f32 activations

    w_scr = 2 * SUB + W  # halo scratch width; interior at sublane-aligned col 8

    out_p = pl.pallas_call(
        _bottleneck_kernel,
        out_shape=jax.ShapeDtypeStruct((N, H, W, Cp), x.dtype),
        grid=(N,),
        in_specs=[
            pl.BlockSpec((1, H, W, Cp), lambda b: (b, 0, 0, 0)),   # x (+residual)
            pl.BlockSpec((Cp, Pp), lambda b: (0, 0)),              # w1 (bn1 folded)
            pl.BlockSpec((1, Pp), lambda b: (0, 0)),               # bn1 bias
            pl.BlockSpec((9, Pp, Pp), lambda b: (0, 0, 0)),        # w2 (bn2 folded)
            pl.BlockSpec((1, Pp), lambda b: (0, 0)),               # bn2 bias
            pl.BlockSpec((Pp, Cp), lambda b: (0, 0)),              # w3 (bn3 folded)
            pl.BlockSpec((1, Cp), lambda b: (0, 0)),               # bn3 bias
        ],
        out_specs=pl.BlockSpec((1, H, W, Cp), lambda b: (b, 0, 0, 0)),
        scratch_shapes=[pltpu.VMEM((H + 2, w_scr, Pp), jnp.float32)],
        compiler_params=pltpu.CompilerParams(
            dimension_semantics=("parallel",)),
    )(x_p, w1p, b1p, w2p, b2p, w3p, b3p)

    out = out_p[:, :, :, :Cout]                            # drop lane padding
    return jnp.transpose(out, (0, 3, 1, 2))                # NHWC -> NCHW


# ----------------------------------------------------------------------------
# Pure-JAX reference (lax.conv, f32) for a correctness check
# ----------------------------------------------------------------------------
def reference_forward(x_nchw, params, w1_hwio, w2_hwio, w3_hwio):
    def conv(x, w, stride=1):
        return jax.lax.conv_general_dilated(
            x, w, (stride, stride), "SAME",
            dimension_numbers=("NHWC", "HWIO", "NHWC"))

    x = jnp.transpose(x_nchw, (0, 2, 3, 1))
    s1, b1 = fold_bn(*params["bn1"])
    s2, b2 = fold_bn(*params["bn2"])
    s3, b3 = fold_bn(*params["bn3"])
    out = jnp.maximum(conv(x, w1_hwio) * s1 + b1, 0.0)
    out = jnp.maximum(conv(out, w2_hwio) * s2 + b2, 0.0)
    out = conv(out, w3_hwio) * s3 + b3 + x
    out = jnp.maximum(out, 0.0)
    return jnp.transpose(out, (0, 3, 1, 2))


# ----------------------------------------------------------------------------
if __name__ == "__main__":
    # Small shapes consistent with the module: inplanes = planes * expansion.
    N, H, W = 2, 8, 8
    planes = 8
    inplanes = planes * 4  # 32 -> downsample=None, residual is x itself.

    key = jax.random.PRNGKey(0)
    ks = jax.random.split(key, 16)

    x = jax.random.normal(ks[0], (N, inplanes, H, W), dtype=jnp.float32)

    # Conv weights in HWIO layout (no conv bias, as in ResNet).
    w1_hwio = jax.random.normal(ks[1], (1, 1, inplanes, planes), jnp.float32) * 0.1
    w2_hwio = jax.random.normal(ks[2], (3, 3, planes, planes), jnp.float32) * 0.1
    w3_hwio = jax.random.normal(ks[3], (1, 1, planes, 4 * planes), jnp.float32) * 0.1

    def bn_params(k, c):
        k1, k2, k3, k4 = jax.random.split(k, 4)
        gamma = jax.random.uniform(k1, (c,), jnp.float32, 0.5, 1.5)
        beta = jax.random.normal(k2, (c,), jnp.float32) * 0.1
        mean = jax.random.normal(k3, (c,), jnp.float32) * 0.1
        var = jax.random.uniform(k4, (c,), jnp.float32, 0.5, 1.5)
        return (gamma, beta, mean, var)

    params = {
        "w1": w1_hwio.reshape(inplanes, planes),
        "w2": w2_hwio,                                   # (3,3,planes,planes) HWIO
        "w3": w3_hwio.reshape(planes, 4 * planes),
        "bn1": bn_params(ks[4], planes),
        "bn2": bn_params(ks[5], planes),
        "bn3": bn_params(ks[6], 4 * planes),
    }

    out = jax.jit(bottleneck_forward)(x, params)
    out = jax.block_until_ready(out)
    assert out.shape == (N, 4 * planes, H, W)

    ref = reference_forward(x, params, w1_hwio, w2_hwio, w3_hwio)
    np.testing.assert_allclose(np.asarray(out), np.asarray(ref),
                               rtol=2e-2, atol=2e-2)

    print("KERNEL_OK")
</pallas_src>

<mosaic_0001>
module attributes {stable_mosaic.version = 11 : i64} {
  func.func @_bottleneck_kernel(%arg0: i32, %arg1: memref<1x8x8x128xf32, #tpu.memory_space<vmem>>, %arg2: memref<128x128xbf16, #tpu.memory_space<vmem>>, %arg3: memref<1x128xf32, #tpu.memory_space<vmem>>, %arg4: memref<9x128x128xbf16, #tpu.memory_space<vmem>>, %arg5: memref<1x128xf32, #tpu.memory_space<vmem>>, %arg6: memref<128x128xbf16, #tpu.memory_space<vmem>>, %arg7: memref<1x128xf32, #tpu.memory_space<vmem>>, %arg8: memref<1x8x8x128xf32, #tpu.memory_space<vmem>>, %arg9: memref<10x24x128xf32, #tpu.memory_space<vmem>>) attributes {dimension_semantics = [#tpu.dimension_semantics<parallel>], iteration_bounds = array<i64: 2>, scalar_prefetch = 0 : i64, scratch_operands = 1 : i64, tpu.core_type = #tpu.core_type<tc>, window_params = [{transform_indices = @transform_0, window_bounds = array<i64: 1, 8, 8, 128>}, {pipeline_mode = #tpu.pipeline_mode<synchronous>, transform_indices = @transform_1, window_bounds = array<i64: 128, 128>}, {pipeline_mode = #tpu.pipeline_mode<synchronous>, transform_indices = @transform_2, window_bounds = array<i64: 1, 128>}, {pipeline_mode = #tpu.pipeline_mode<synchronous>, transform_indices = @transform_3, window_bounds = array<i64: 9, 128, 128>}, {pipeline_mode = #tpu.pipeline_mode<synchronous>, transform_indices = @transform_4, window_bounds = array<i64: 1, 128>}, {pipeline_mode = #tpu.pipeline_mode<synchronous>, transform_indices = @transform_5, window_bounds = array<i64: 128, 128>}, {pipeline_mode = #tpu.pipeline_mode<synchronous>, transform_indices = @transform_6, window_bounds = array<i64: 1, 128>}, {transform_indices = @transform_7, window_bounds = array<i64: 1, 8, 8, 128>}]} {
    %c0 = arith.constant 0 : index
    %c0_0 = arith.constant 0 : index
    %c0_1 = arith.constant 0 : index
    %c0_2 = arith.constant 0 : index
    %0 = vector.load %arg1[%c0, %c0_0, %c0_1, %c0_2] : memref<1x8x8x128xf32, #tpu.memory_space<vmem>>, vector<1x8x8x128xf32>
    %1 = vector.shape_cast %0 : vector<1x8x8x128xf32> to vector<64x128xf32>
    %2 = arith.truncf %1 : vector<64x128xf32> to vector<64x128xbf16>
    %c0_3 = arith.constant 0 : index
    %c0_4 = arith.constant 0 : index
    %3 = vector.load %arg2[%c0_3, %c0_4] : memref<128x128xbf16, #tpu.memory_space<vmem>>, vector<128x128xbf16>
    %cst = arith.constant dense<0.000000e+00> : vector<64x128xf32>
    %4 = tpu.matmul %2, %3, %cst {dimension_numbers = #tpu.dot_dimension_numbers<[1], [0], [0], [1], [0, 0, 1, 1], [], []>} : vector<64x128xbf16>, vector<128x128xbf16>, vector<64x128xf32> -> vector<64x128xf32>
    %c0_5 = arith.constant 0 : index
    %c0_6 = arith.constant 0 : index
    %5 = vector.load %arg3[%c0_5, %c0_6] : memref<1x128xf32, #tpu.memory_space<vmem>>, vector<1x128xf32>
    %6 = vector.broadcast %5 : vector<1x128xf32> to vector<64x128xf32>
    %7 = arith.addf %4, %6 : vector<64x128xf32>
    %cst_7 = arith.constant 0.000000e+00 : f32
    %8 = vector.broadcast %cst_7 : f32 to vector<64x128xf32>
    %9 = arith.maximumf %7, %8 : vector<64x128xf32>
    %cst_8 = arith.constant 0.000000e+00 : f32
    %10 = vector.broadcast %cst_8 : f32 to vector<10x24x128xf32>
    %c0_9 = arith.constant 0 : index
    %c0_10 = arith.constant 0 : index
    %c0_11 = arith.constant 0 : index
    %11 = vector.load %arg9[%c0_9, %c0_10, %c0_11] : memref<10x24x128xf32, #tpu.memory_space<vmem>>, vector<10x24x128xf32>
    tpu.vector_store %arg9[%c0_9, %c0_10, %c0_11], %10 {strides = array<i32>} : memref<10x24x128xf32, #tpu.memory_space<vmem>>, vector<10x24x128xf32>,
    %12 = vector.shape_cast %9 : vector<64x128xf32> to vector<8x8x128xf32>
    %c1 = arith.constant 1 : index
    %c8 = arith.constant 8 : index
    %c0_12 = arith.constant 0 : index
    %13 = vector.load %arg9[%c1, %c8, %c0_12] : memref<10x24x128xf32, #tpu.memory_space<vmem>>, vector<8x8x128xf32>
    tpu.vector_store %arg9[%c1, %c8, %c0_12], %12 {strides = array<i32>} : memref<10x24x128xf32, #tpu.memory_space<vmem>>, vector<8x8x128xf32>,
    %cst_13 = arith.constant 0.000000e+00 : f32
    %14 = vector.broadcast %cst_13 : f32 to vector<64x128xf32>
    %c0_14 = arith.constant 0 : index
    %c7 = arith.constant 7 : index
    %c0_15 = arith.constant 0 : index
    %15 = vector.load %arg9[%c0_14, %c7, %c0_15] : memref<10x24x128xf32, #tpu.memory_space<vmem>>, vector<8x8x128xf32>
    %16 = vector.shape_cast %15 : vector<8x8x128xf32> to vector<64x128xf32>
    %17 = arith.truncf %16 : vector<64x128xf32> to vector<64x128xbf16>
    %c0_16 = arith.constant 0 : index
    %c0_17 = arith.constant 0 : index
    %c0_18 = arith.constant 0 : index
    %18 = vector.load %arg4[%c0_16, %c0_17, %c0_18] : memref<9x128x128xbf16, #tpu.memory_space<vmem>>, vector<1x128x128xbf16>
    %19 = vector.shape_cast %18 : vector<1x128x128xbf16> to vector<128x128xbf16>
    %cst_19 = arith.constant dense<0.000000e+00> : vector<64x128xf32>
    %20 = tpu.matmul %17, %19, %cst_19 {dimension_numbers = #tpu.dot_dimension_numbers<[1], [0], [0], [1], [0, 0, 1, 1], [], []>} : vector<64x128xbf16>, vector<128x128xbf16>, vector<64x128xf32> -> vector<64x128xf32>
    %21 = arith.addf %14, %20 : vector<64x128xf32>
    %c0_20 = arith.constant 0 : index
    %c8_21 = arith.constant 8 : index
    %c0_22 = arith.constant 0 : index
    %22 = vector.load %arg9[%c0_20, %c8_21, %c0_22] : memref<10x24x128xf32, #tpu.memory_space<vmem>>, vector<8x8x128xf32>
    %23 = vector.shape_cast %22 : vector<8x8x128xf32> to vector<64x128xf32>
    %24 = arith.truncf %23 : vector<64x128xf32> to vector<64x128xbf16>
    %c1_23 = arith.constant 1 : index
    %c0_24 = arith.constant 0 : index
    %c0_25 = arith.constant 0 : index
    %25 = vector.load %arg4[%c1_23, %c0_24, %c0_25] : memref<9x128x128xbf16, #tpu.memory_space<vmem>>, vector<1x128x128xbf16>
    %26 = vector.shape_cast %25 : vector<1x128x128xbf16> to vector<128x128xbf16>
    %cst_26 = arith.constant dense<0.000000e+00> : vector<64x128xf32>
    %27 = tpu.matmul %24, %26, %cst_26 {dimension_numbers = #tpu.dot_dimension_numbers<[1], [0], [0], [1], [0, 0, 1, 1], [], []>} : vector<64x128xbf16>, vector<128x128xbf16>, vector<64x128xf32> -> vector<64x128xf32>
    %28 = arith.addf %21, %27 : vector<64x128xf32>
    %c0_27 = arith.constant 0 : index
    %c9 = arith.constant 9 : index
    %c0_28 = arith.constant 0 : index
    %29 = vector.load %arg9[%c0_27, %c9, %c0_28] : memref<10x24x128xf32, #tpu.memory_space<vmem>>, vector<8x8x128xf32>
    %30 = vector.shape_cast %29 : vector<8x8x128xf32> to vector<64x128xf32>
    %31 = arith.truncf %30 : vector<64x128xf32> to vector<64x128xbf16>
    %c2 = arith.constant 2 : index
    %c0_29 = arith.constant 0 : index
    %c0_30 = arith.constant 0 : index
    %32 = vector.load %arg4[%c2, %c0_29, %c0_30] : memref<9x128x128xbf16, #tpu.memory_space<vmem>>, vector<1x128x128xbf16>
    %33 = vector.shape_cast %32 : vector<1x128x128xbf16> to vector<128x128xbf16>
    %cst_31 = arith.constant dense<0.000000e+00> : vector<64x128xf32>
    %34 = tpu.matmul %31, %33, %cst_31 {dimension_numbers = #tpu.dot_dimension_numbers<[1], [0], [0], [1], [0, 0, 1, 1], [], []>} : vector<64x128xbf16>, vector<128x128xbf16>, vector<64x128xf32> -> vector<64x128xf32>
    %35 = arith.addf %28, %34 : vector<64x128xf32>
    %c1_32 = arith.constant 1 : index
    %c7_33 = arith.constant 7 : index
    %c0_34 = arith.constant 0 : index
    %36 = vector.load %arg9[%c1_32, %c7_33, %c0_34] : memref<10x24x128xf32, #tpu.memory_space<vmem>>, vector<8x8x128xf32>
    %37 = vector.shape_cast %36 : vector<8x8x128xf32> to vector<64x128xf32>
    %38 = arith.truncf %37 : vector<64x128xf32> to vector<64x128xbf16>
    %c3 = arith.constant 3 : index
    %c0_35 = arith.constant 0 : index
    %c0_36 = arith.constant 0 : index
    %39 = vector.load %arg4[%c3, %c0_35, %c0_36] : memref<9x128x128xbf16, #tpu.memory_space<vmem>>, vector<1x128x128xbf16>
    %40 = vector.shape_cast %39 : vector<1x128x128xbf16> to vector<128x128xbf16>
    %cst_37 = arith.constant dense<0.000000e+00> : vector<64x128xf32>
    %41 = tpu.matmul %38, %40, %cst_37 {dimension_numbers = #tpu.dot_dimension_numbers<[1], [0], [0], [1], [0, 0, 1, 1], [], []>} : vector<64x128xbf16>, vector<128x128xbf16>, vector<64x128xf32> -> vector<64x128xf32>
    %42 = arith.addf %35, %41 : vector<64x128xf32>
    %c1_38 = arith.constant 1 : index
    %c8_39 = arith.constant 8 : index
    %c0_40 = arith.constant 0 : index
    %43 = vector.load %arg9[%c1_38, %c8_39, %c0_40] : memref<10x24x128xf32, #tpu.memory_space<vmem>>, vector<8x8x128xf32>
    %44 = vector.shape_cast %43 : vector<8x8x128xf32> to vector<64x128xf32>
    %45 = arith.truncf %44 : vector<64x128xf32> to vector<64x128xbf16>
    %c4 = arith.constant 4 : index
    %c0_41 = arith.constant 0 : index
    %c0_42 = arith.constant 0 : index
    %46 = vector.load %arg4[%c4, %c0_41, %c0_42] : memref<9x128x128xbf16, #tpu.memory_space<vmem>>, vector<1x128x128xbf16>
    %47 = vector.shape_cast %46 : vector<1x128x128xbf16> to vector<128x128xbf16>
    %cst_43 = arith.constant dense<0.000000e+00> : vector<64x128xf32>
    %48 = tpu.matmul %45, %47, %cst_43 {dimension_numbers = #tpu.dot_dimension_numbers<[1], [0], [0], [1], [0, 0, 1, 1], [], []>} : vector<64x128xbf16>, vector<128x128xbf16>, vector<64x128xf32> -> vector<64x128xf32>
    %49 = arith.addf %42, %48 : vector<64x128xf32>
    %c1_44 = arith.constant 1 : index
    %c9_45 = arith.constant 9 : index
    %c0_46 = arith.constant 0 : index
    %50 = vector.load %arg9[%c1_44, %c9_45, %c0_46] : memref<10x24x128xf32, #tpu.memory_space<vmem>>, vector<8x8x128xf32>
    %51 = vector.shape_cast %50 : vector<8x8x128xf32> to vector<64x128xf32>
    %52 = arith.truncf %51 : vector<64x128xf32> to vector<64x128xbf16>
    %c5 = arith.constant 5 : index
    %c0_47 = arith.constant 0 : index
    %c0_48 = arith.constant 0 : index
    %53 = vector.load %arg4[%c5, %c0_47, %c0_48] : memref<9x128x128xbf16, #tpu.memory_space<vmem>>, vector<1x128x128xbf16>
    %54 = vector.shape_cast %53 : vector<1x128x128xbf16> to vector<128x128xbf16>
    %cst_49 = arith.constant dense<0.000000e+00> : vector<64x128xf32>
    %55 = tpu.matmul %52, %54, %cst_49 {dimension_numbers = #tpu.dot_dimension_numbers<[1], [0], [0], [1], [0, 0, 1, 1], [], []>} : vector<64x128xbf16>, vector<128x128xbf16>, vector<64x128xf32> -> vector<64x128xf32>
    %56 = arith.addf %49, %55 : vector<64x128xf32>
    %c2_50 = arith.constant 2 : index
    %c7_51 = arith.constant 7 : index
    %c0_52 = arith.constant 0 : index
    %57 = vector.load %arg9[%c2_50, %c7_51, %c0_52] : memref<10x24x128xf32, #tpu.memory_space<vmem>>, vector<8x8x128xf32>
    %58 = vector.shape_cast %57 : vector<8x8x128xf32> to vector<64x128xf32>
    %59 = arith.truncf %58 : vector<64x128xf32> to vector<64x128xbf16>
    %c6 = arith.constant 6 : index
    %c0_53 = arith.constant 0 : index
    %c0_54 = arith.constant 0 : index
    %60 = vector.load %arg4[%c6, %c0_53, %c0_54] : memref<9x128x128xbf16, #tpu.memory_space<vmem>>, vector<1x128x128xbf16>
    %61 = vector.shape_cast %60 : vector<1x128x128xbf16> to vector<128x128xbf16>
    %cst_55 = arith.constant dense<0.000000e+00> : vector<64x128xf32>
    %62 = tpu.matmul %59, %61, %cst_55 {dimension_numbers = #tpu.dot_dimension_numbers<[1], [0], [0], [1], [0, 0, 1, 1], [], []>} : vector<64x128xbf16>, vector<128x128xbf16>, vector<64x128xf32> -> vector<64x128xf32>
    %63 = arith.addf %56, %62 : vector<64x128xf32>
    %c2_56 = arith.constant 2 : index
    %c8_57 = arith.constant 8 : index
    %c0_58 = arith.constant 0 : index
    %64 = vector.load %arg9[%c2_56, %c8_57, %c0_58] : memref<10x24x128xf32, #tpu.memory_space<vmem>>, vector<8x8x128xf32>
    %65 = vector.shape_cast %64 : vector<8x8x128xf32> to vector<64x128xf32>
    %66 = arith.truncf %65 : vector<64x128xf32> to vector<64x128xbf16>
    %c7_59 = arith.constant 7 : index
    %c0_60 = arith.constant 0 : index
    %c0_61 = arith.constant 0 : index
    %67 = vector.load %arg4[%c7_59, %c0_60, %c0_61] : memref<9x128x128xbf16, #tpu.memory_space<vmem>>, vector<1x128x128xbf16>
    %68 = vector.shape_cast %67 : vector<1x128x128xbf16> to vector<128x128xbf16>
    %cst_62 = arith.constant dense<0.000000e+00> : vector<64x128xf32>
    %69 = tpu.matmul %66, %68, %cst_62 {dimension_numbers = #tpu.dot_dimension_numbers<[1], [0], [0], [1], [0, 0, 1, 1], [], []>} : vector<64x128xbf16>, vector<128x128xbf16>, vector<64x128xf32> -> vector<64x128xf32>
    %70 = arith.addf %63, %69 : vector<64x128xf32>
    %c2_63 = arith.constant 2 : index
    %c9_64 = arith.constant 9 : index
    %c0_65 = arith.constant 0 : index
    %71 = vector.load %arg9[%c2_63, %c9_64, %c0_65] : memref<10x24x128xf32, #tpu.memory_space<vmem>>, vector<8x8x128xf32>
    %72 = vector.shape_cast %71 : vector<8x8x128xf32> to vector<64x128xf32>
    %73 = arith.truncf %72 : vector<64x128xf32> to vector<64x128xbf16>
    %c8_66 = arith.constant 8 : index
    %c0_67 = arith.constant 0 : index
    %c0_68 = arith.constant 0 : index
    %74 = vector.load %arg4[%c8_66, %c0_67, %c0_68] : memref<9x128x128xbf16, #tpu.memory_space<vmem>>, vector<1x128x128xbf16>
    %75 = vector.shape_cast %74 : vector<1x128x128xbf16> to vector<128x128xbf16>
    %cst_69 = arith.constant dense<0.000000e+00> : vector<64x128xf32>
    %76 = tpu.matmul %73, %75, %cst_69 {dimension_numbers = #tpu.dot_dimension_numbers<[1], [0], [0], [1], [0, 0, 1, 1], [], []>} : vector<64x128xbf16>, vector<128x128xbf16>, vector<64x128xf32> -> vector<64x128xf32>
    %77 = arith.addf %70, %76 : vector<64x128xf32>
    %c0_70 = arith.constant 0 : index
    %c0_71 = arith.constant 0 : index
    %78 = vector.load %arg5[%c0_70, %c0_71] : memref<1x128xf32, #tpu.memory_space<vmem>>, vector<1x128xf32>
    %79 = vector.broadcast %78 : vector<1x128xf32> to vector<64x128xf32>
    %80 = arith.addf %77, %79 : vector<64x128xf32>
    %cst_72 = arith.constant 0.000000e+00 : f32
    %81 = vector.broadcast %cst_72 : f32 to vector<64x128xf32>
    %82 = arith.maximumf %80, %81 : vector<64x128xf32>
    %83 = arith.truncf %82 : vector<64x128xf32> to vector<64x128xbf16>
    %c0_73 = arith.constant 0 : index
    %c0_74 = arith.constant 0 : index
    %84 = vector.load %arg6[%c0_73, %c0_74] : memref<128x128xbf16, #tpu.memory_space<vmem>>, vector<128x128xbf16>
    %cst_75 = arith.constant dense<0.000000e+00> : vector<64x128xf32>
    %85 = tpu.matmul %83, %84, %cst_75 {dimension_numbers = #tpu.dot_dimension_numbers<[1], [0], [0], [1], [0, 0, 1, 1], [], []>} : vector<64x128xbf16>, vector<128x128xbf16>, vector<64x128xf32> -> vector<64x128xf32>
    %c0_76 = arith.constant 0 : index
    %c0_77 = arith.constant 0 : index
    %86 = vector.load %arg7[%c0_76, %c0_77] : memref<1x128xf32, #tpu.memory_space<vmem>>, vector<1x128xf32>
    %87 = vector.broadcast %86 : vector<1x128xf32> to vector<64x128xf32>
    %88 = arith.addf %85, %87 : vector<64x128xf32>
    %89 = arith.addf %88, %1 : vector<64x128xf32>
    %cst_78 = arith.constant 0.000000e+00 : f32
    %90 = vector.broadcast %cst_78 : f32 to vector<64x128xf32>
    %91 = arith.maximumf %89, %90 : vector<64x128xf32>
    %92 = vector.shape_cast %91 : vector<64x128xf32> to vector<1x8x8x128xf32>
    %c0_79 = arith.constant 0 : index
    %c0_80 = arith.constant 0 : index
    %c0_81 = arith.constant 0 : index
    %c0_82 = arith.constant 0 : index
    %93 = vector.load %arg8[%c0_79, %c0_80, %c0_81, %c0_82] : memref<1x8x8x128xf32, #tpu.memory_space<vmem>>, vector<1x8x8x128xf32>
    tpu.vector_store %arg8[%c0_79, %c0_80, %c0_81, %c0_82], %92 {strides = array<i32>} : memref<1x8x8x128xf32, #tpu.memory_space<vmem>>, vector<1x8x8x128xf32>,
    return
  }
  func.func @transform_0(%arg0: i32) -> (i32, i32, i32, i32) {
    %c0_i32 = arith.constant 0 : i32
    %c0_i32_0 = arith.constant 0 : i32
    %c0_i32_1 = arith.constant 0 : i32
    %c0_i32_2 = arith.constant 0 : i32
    return %arg0, %c0_i32, %c0_i32_0, %c0_i32_1 : i32, i32, i32, i32
  }
  func.func @transform_1(%arg0: i32) -> (i32, i32) {
    %c0_i32 = arith.constant 0 : i32
    %c0_i32_0 = arith.constant 0 : i32
    %c0_i32_1 = arith.constant 0 : i32
    return %c0_i32, %c0_i32_0 : i32, i32
  }
  func.func @transform_2(%arg0: i32) -> (i32, i32) {
    %c0_i32 = arith.constant 0 : i32
    %c0_i32_0 = arith.constant 0 : i32
    %c0_i32_1 = arith.constant 0 : i32
    return %c0_i32, %c0_i32_0 : i32, i32
  }
  func.func @transform_3(%arg0: i32) -> (i32, i32, i32) {
    %c0_i32 = arith.constant 0 : i32
    %c0_i32_0 = arith.constant 0 : i32
    %c0_i32_1 = arith.constant 0 : i32
    %c0_i32_2 = arith.constant 0 : i32
    return %c0_i32, %c0_i32_0, %c0_i32_1 : i32, i32, i32
  }
  func.func @transform_4(%arg0: i32) -> (i32, i32) {
    %c0_i32 = arith.constant 0 : i32
    %c0_i32_0 = arith.constant 0 : i32
    %c0_i32_1 = arith.constant 0 : i32
    return %c0_i32, %c0_i32_0 : i32, i32
  }
  func.func @transform_5(%arg0: i32) -> (i32, i32) {
    %c0_i32 = arith.constant 0 : i32
    %c0_i32_0 = arith.constant 0 : i32
    %c0_i32_1 = arith.constant 0 : i32
    return %c0_i32, %c0_i32_0 : i32, i32
  }
  func.func @transform_6(%arg0: i32) -> (i32, i32) {
    %c0_i32 = arith.constant 0 : i32
    %c0_i32_0 = arith.constant 0 : i32
    %c0_i32_1 = arith.constant 0 : i32
    return %c0_i32, %c0_i32_0 : i32, i32
  }
  func.func @transform_7(%arg0: i32) -> (i32, i32, i32, i32) {
    %c0_i32 = arith.constant 0 : i32
    %c0_i32_0 = arith.constant 0 : i32
    %c0_i32_1 = arith.constant 0 : i32
    %c0_i32_2 = arith.constant 0 : i32
    return %arg0, %c0_i32, %c0_i32_0, %c0_i32_1 : i32, i32, i32, i32
  }
}

</mosaic_0001>

<llo_original>
// kernel: bottleneck_forward.1
$region0: #{bottleneck_forward.1}
  #allocation0 [shape = 'u32[]', space=smem, size = 0x4, offset = 0x4, fixed_abs, tag = 'smem constant byte address 0x4 - core index']
  #allocation1 [shape = 'u32[72,128]{1,0:T(1,128)}', space=vmem, size = 0x9000, scoped, tag = 'internal scratch']
  #allocation2 [shape = 'f32[10,24,128]{2,1,0:T(8,128)}', space=vmem, size = 0x1e000, scoped, tag = 'scratch operand']
  %s0 = inlined_call_operand.vmem [shape: f32[2,8,8,128], index: 0, kind: input, shape index: {}]
  %s1 = inlined_call_operand.vmem [shape: bf16[128,128], index: 1, kind: input, shape index: {}]
  %s2 = inlined_call_operand.vmem [shape: f32[1,128], index: 2, kind: input, shape index: {}]
  %s3 = inlined_call_operand.vmem [shape: bf16[9,128,128], index: 3, kind: input, shape index: {}]
  %s4 = inlined_call_operand.vmem [shape: f32[1,128], index: 4, kind: input, shape index: {}]
  %s5 = inlined_call_operand.vmem [shape: bf16[128,128], index: 5, kind: input, shape index: {}]
  %s6 = inlined_call_operand.vmem [shape: f32[1,128], index: 6, kind: input, shape index: {}]
  %s7 = inlined_call_operand.vmem [shape: f32[2,8,8,128], index: 7, kind: output, shape index: {}]
  %s8 = sld [smem:[#allocation0]]
  $region61: #{bottleneck_forward.1} parent=0
    _
  %s10 = ssub.s32 1, %s8
  %s11 = scalar_select 0, %s10, %s8
  loop: start=0, step=1, limit=4
  $region2: #{bottleneck_forward.1} parent=0 // loop_pre_header
    _
  $region3: #{bottleneck_forward.1} parent=0 // loop_header
    %s13 = sphi 0, %s17
    %p14 = scmp.ge.s32.totalorder %s13, 4
    %s23 = sphi 0, %s25
    %s26 = sphi 0, %s23
    %s27 = sphi 0, %s26
    %s43 = sphi 0, %s27
    %s47 = sphi 0, %s47
    %s49 = sphi 0, %s47
    %s50 = sphi 0, %s49
    %s64 = sphi 0, %s50
    %s68 = sphi 0, %s68
    %s70 = sphi 0, %s68
    %s71 = sphi 0, %s70
    %s85 = sphi 0, %s71
    %s89 = sphi 0, %s89
    %s91 = sphi 0, %s89
    %s92 = sphi 0, %s91
    %s106 = sphi 0, %s92
    %s110 = sphi 0, %s110
    %s112 = sphi 0, %s110
    %s113 = sphi 0, %s112
    %s127 = sphi 0, %s113
    %s131 = sphi 0, %s131
    %s133 = sphi 0, %s131
    %s134 = sphi 0, %s133
    %s148 = sphi 0, %s134
    %s152 = sphi 0, %s152
    %s154 = sphi 0, %s152
    %s155 = sphi 0, %s154
    %s169 = sphi 0, %s155
    %s175 = sphi 0, %s177
    %s178 = sphi 0, %s175
    %s179 = sphi 0, %s178
    %s195 = sphi 0, %s179
  $region4: #{bottleneck_forward.1} parent=0 // loop_header_branch
    %16 = sbr.rel (%p14) target = $region8
  $region5: #{bottleneck_forward.1} parent=0 // loop_body
    %s18 = ssub.s32 %s13, 1
    %s19 = ssub.s32 %s13, 2
    %s20 = sadd.s32 %s13, 1
    %s21 = ssub.s32 %s13, %s20
    %p22 = scmp.eq.s32.totalorder %s21, 0
    %s24 = sadd.s32 %s23, 1
    %s25 = scalar_select %p22, %s23, %s24
    %p28 = pneg %p22
    %p29 = scmp.eq.s32.totalorder %s13, 1
    %p30 = por %p28, %p29
    %p31 = scmp.ne.s32.totalorder %s23, %s26
    %p32 = scmp.eq.s32.totalorder %s13, 0
    %p33 = por %p31, %p32
    %p34 = scmp.ne.s32.totalorder %s23, %s26
    %p35 = scmp.eq.s32.totalorder %s18, 1
    %p36 = por %p34, %p35
    %p37 = scmp.ne.s32.totalorder %s26, %s27
    %p38 = scmp.eq.s32.totalorder %s18, 0
    %p39 = por %p37, %p38
    %p40 = scmp.ne.s32.totalorder %s26, %s27
    %p41 = scmp.eq.s32.totalorder %s19, 1
    %p42 = por %p40, %p41
    %p44 = scmp.ne.s32.totalorder %s27, %s43
    %p45 = scmp.eq.s32.totalorder %s19, 0
    %p46 = por %p44, %p45
    %s48 = sadd.s32 %s47, 1
    %p51 = scmp.eq.s32.totalorder %s13, 1
    %p52 = scmp.ne.s32.totalorder %s47, %s49
    %p53 = scmp.eq.s32.totalorder %s13, 0
    %p54 = por %p52, %p53
    %p55 = scmp.ne.s32.totalorder %s47, %s49
    %p56 = scmp.eq.s32.totalorder %s18, 1
    %p57 = por %p55, %p56
    %p58 = scmp.ne.s32.totalorder %s49, %s50
    %p59 = scmp.eq.s32.totalorder %s18, 0
    %p60 = por %p58, %p59
    %p61 = scmp.ne.s32.totalorder %s49, %s50
    %p62 = scmp.eq.s32.totalorder %s19, 1
    %p63 = por %p61, %p62
    %p65 = scmp.ne.s32.totalorder %s50, %s64
    %p66 = scmp.eq.s32.totalorder %s19, 0
    %p67 = por %p65, %p66
    %s69 = sadd.s32 %s68, 1
    %p72 = scmp.eq.s32.totalorder %s13, 1
    %p73 = scmp.ne.s32.totalorder %s68, %s70
    %p74 = scmp.eq.s32.totalorder %s13, 0
    %p75 = por %p73, %p74
    %p76 = scmp.ne.s32.totalorder %s68, %s70
    %p77 = scmp.eq.s32.totalorder %s18, 1
    %p78 = por %p76, %p77
    %p79 = scmp.ne.s32.totalorder %s70, %s71
    %p80 = scmp.eq.s32.totalorder %s18, 0
    %p81 = por %p79, %p80
    %p82 = scmp.ne.s32.totalorder %s70, %s71
    %p83 = scmp.eq.s32.totalorder %s19, 1
    %p84 = por %p82, %p83
    %p86 = scmp.ne.s32.totalorder %s71, %s85
    %p87 = scmp.eq.s32.totalorder %s19, 0
    %p88 = por %p86, %p87
    %s90 = sadd.s32 %s89, 1
    %p93 = scmp.eq.s32.totalorder %s13, 1
    %p94 = scmp.ne.s32.totalorder %s89, %s91
    %p95 = scmp.eq.s32.totalorder %s13, 0
    %p96 = por %p94, %p95
    %p97 = scmp.ne.s32.totalorder %s89, %s91
    %p98 = scmp.eq.s32.totalorder %s18, 1
    %p99 = por %p97, %p98
    %p100 = scmp.ne.s32.totalorder %s91, %s92
    %p101 = scmp.eq.s32.totalorder %s18, 0
    %p102 = por %p100, %p101
    %p103 = scmp.ne.s32.totalorder %s91, %s92
    %p104 = scmp.eq.s32.totalorder %s19, 1
    %p105 = por %p103, %p104
    %p107 = scmp.ne.s32.totalorder %s92, %s106
    %p108 = scmp.eq.s32.totalorder %s19, 0
    %p109 = por %p107, %p108
    %s111 = sadd.s32 %s110, 1
    %p114 = scmp.eq.s32.totalorder %s13, 1
    %p115 = scmp.ne.s32.totalorder %s110, %s112
    %p116 = scmp.eq.s32.totalorder %s13, 0
    %p117 = por %p115, %p116
    %p118 = scmp.ne.s32.totalorder %s110, %s112
    %p119 = scmp.eq.s32.totalorder %s18, 1
    %p120 = por %p118, %p119
    %p121 = scmp.ne.s32.totalorder %s112, %s113
    %p122 = scmp.eq.s32.totalorder %s18, 0
    %p123 = por %p121, %p122
    %p124 = scmp.ne.s32.totalorder %s112, %s113
    %p125 = scmp.eq.s32.totalorder %s19, 1
    %p126 = por %p124, %p125
    %p128 = scmp.ne.s32.totalorder %s113, %s127
    %p129 = scmp.eq.s32.totalorder %s19, 0
    %p130 = por %p128, %p129
    %s132 = sadd.s32 %s131, 1
    %p135 = scmp.eq.s32.totalorder %s13, 1
    %p136 = scmp.ne.s32.totalorder %s131, %s133
    %p137 = scmp.eq.s32.totalorder %s13, 0
    %p138 = por %p136, %p137
    %p139 = scmp.ne.s32.totalorder %s131, %s133
    %p140 = scmp.eq.s32.totalorder %s18, 1
    %p141 = por %p139, %p140
    %p142 = scmp.ne.s32.totalorder %s133, %s134
    %p143 = scmp.eq.s32.totalorder %s18, 0
    %p144 = por %p142, %p143
    %p145 = scmp.ne.s32.totalorder %s133, %s134
    %p146 = scmp.eq.s32.totalorder %s19, 1
    %p147 = por %p145, %p146
    %p149 = scmp.ne.s32.totalorder %s134, %s148
    %p150 = scmp.eq.s32.totalorder %s19, 0
    %p151 = por %p149, %p150
    %s153 = sadd.s32 %s152, 1
    %p156 = scmp.eq.s32.totalorder %s13, 1
    %p157 = scmp.ne.s32.totalorder %s152, %s154
    %p158 = scmp.eq.s32.totalorder %s13, 0
    %p159 = por %p157, %p158
    %p160 = scmp.ne.s32.totalorder %s152, %s154
    %p161 = scmp.eq.s32.totalorder %s18, 1
    %p162 = por %p160, %p161
    %p163 = scmp.ne.s32.totalorder %s154, %s155
    %p164 = scmp.eq.s32.totalorder %s18, 0
    %p165 = por %p163, %p164
    %p166 = scmp.ne.s32.totalorder %s154, %s155
    %p167 = scmp.eq.s32.totalorder %s19, 1
    %p168 = por %p166, %p167
    %p170 = scmp.ne.s32.totalorder %s155, %s169
    %p171 = scmp.eq.s32.totalorder %s19, 0
    %p172 = por %p170, %p171
    %s173 = ssub.s32 %s13, %s20
    %p174 = scmp.eq.s32.totalorder %s173, 0
    %s176 = sadd.s32 %s175, 1
    %s177 = scalar_select %p174, %s175, %s176
    %p180 = pneg %p174
    %p181 = scmp.eq.s32.totalorder %s13, 1
    %p182 = por %p180, %p181
    %p183 = scmp.ne.s32.totalorder %s175, %s178
    %p184 = scmp.eq.s32.totalorder %s13, 0
    %p185 = por %p183, %p184
    %p186 = scmp.ne.s32.totalorder %s175, %s178
    %p187 = scmp.eq.s32.totalorder %s18, 1
    %p188 = por %p186, %p187
    %p189 = scmp.ne.s32.totalorder %s178, %s179
    %p190 = scmp.eq.s32.totalorder %s18, 0
    %p191 = por %p189, %p190
    %p192 = scmp.ne.s32.totalorder %s178, %s179
    %p193 = scmp.eq.s32.totalorder %s19, 1
    %p194 = por %p192, %p193
    %p196 = scmp.ne.s32.totalorder %s179, %s195
    %p197 = scmp.eq.s32.totalorder %s19, 0
    %p198 = por %p196, %p197
    %p199 = scmp.le.s32.totalorder 1, %s13
    %p200 = scmp.lt.s32.totalorder %s13, 3
    %p201 = pnand %p199, %p200
    %p202 = pneg %p201
    // Predicated region
    $region9: #{bottleneck_forward.1} parent=5 // pred_check
      _
    $region10: #{bottleneck_forward.1} parent=5 // pred_check_branch
      %204 = sbr.rel (%p201) target = $region12
    $region11: #{bottleneck_forward.1} parent=5 // pred_region
      %s205 = ssub.s32 %s13, 1
      // Predicated region
      $region13: #{bottleneck_forward.1} parent=11 // pred_check
        %p206 = pneg %p60
      $region14: #{bottleneck_forward.1} parent=11 // pred_check_branch
        %208 = sbr.rel (%p206) target = $region16
      $region15: #{bottleneck_forward.1} parent=11 // pred_region
        _
      $region16: #{bottleneck_forward.1} parent=11 // pred_fallthru
        _
      // Predicated region
      $region17: #{bottleneck_forward.1} parent=11 // pred_check
        %p209 = pneg %p81
      $region18: #{bottleneck_forward.1} parent=11 // pred_check_branch
        %211 = sbr.rel (%p209) target = $region20
      $region19: #{bottleneck_forward.1} parent=11 // pred_region
        _
      $region20: #{bottleneck_forward.1} parent=11 // pred_fallthru
        _
      // Predicated region
      $region21: #{bottleneck_forward.1} parent=11 // pred_check
        %p212 = pneg %p102
      $region22: #{bottleneck_forward.1} parent=11 // pred_check_branch
        %214 = sbr.rel (%p212) target = $region24
      $region23: #{bottleneck_forward.1} parent=11 // pred_region
        _
      $region24: #{bottleneck_forward.1} parent=11 // pred_fallthru
        _
      // Predicated region
      $region25: #{bottleneck_forward.1} parent=11 // pred_check
        %p215 = pneg %p123
      $region26: #{bottleneck_forward.1} parent=11 // pred_check_branch
        %217 = sbr.rel (%p215) target = $region28
      $region27: #{bottleneck_forward.1} parent=11 // pred_region
        _
      $region28: #{bottleneck_forward.1} parent=11 // pred_fallthru
        _
      // Predicated region
      $region29: #{bottleneck_forward.1} parent=11 // pred_check
        %p218 = pneg %p144
      $region30: #{bottleneck_forward.1} parent=11 // pred_check_branch
        %220 = sbr.rel (%p218) target = $region32
      $region31: #{bottleneck_forward.1} parent=11 // pred_region
        _
      $region32: #{bottleneck_forward.1} parent=11 // pred_fallthru
        _
      // Predicated region
      $region33: #{bottleneck_forward.1} parent=11 // pred_check
        %p221 = pneg %p165
      $region34: #{bottleneck_forward.1} parent=11 // pred_check_branch
        %223 = sbr.rel (%p221) target = $region36
      $region35: #{bottleneck_forward.1} parent=11 // pred_region
        _
      $region36: #{bottleneck_forward.1} parent=11 // pred_fallthru
        _
    $region12: #{bottleneck_forward.1} parent=5 // pred_fallthru
      _
    %p224 = scmp.lt.s32.totalorder %s13, 2
    // Predicated region
    $region37: #{bottleneck_forward.1} parent=5 // pred_check
      %p225 = pneg %p224
    $region38: #{bottleneck_forward.1} parent=5 // pred_check_branch
      %227 = sbr.rel (%p225) target = $region40
    $region39: #{bottleneck_forward.1} parent=5 // pred_region
      // Predicated region
      $region41: #{bottleneck_forward.1} parent=39 // pred_check
        %p228 = pneg %p33
      $region42: #{bottleneck_forward.1} parent=39 // pred_check_branch
        %230 = sbr.rel (%p228) target = $region44
      $region43: #{bottleneck_forward.1} parent=39 // pred_region
        %p231 = scmp.lt.s32.totalorder %s13, 1
        %s232 = scalar_select %p231, %s13, 1
        %s233 = smul.addr %s232, 8
        %s234 = smul.addr %s233, 8
        %s235 = scalar_lea.vmem %s0, %s234
      $region44: #{bottleneck_forward.1} parent=39 // pred_fallthru
        _
    $region40: #{bottleneck_forward.1} parent=5 // pred_fallthru
      _
    %p236 = scmp.le.s32.totalorder 1, %s13
    %p237 = scmp.lt.s32.totalorder %s13, 3
    %p238 = pnand %p236, %p237
    %p239 = pneg %p238
    // Predicated region
    $region45: #{bottleneck_forward.1} parent=5 // pred_check
      _
    $region46: #{bottleneck_forward.1} parent=5 // pred_check_branch
      %241 = sbr.rel (%p238) target = $region48
    $region47: #{bottleneck_forward.1} parent=5 // pred_region
      %s242 = ssub.s32 %s13, 1
      %p243 = scmp.lt.s32.totalorder %s18, 1
      %s244 = scalar_select %p243, %s18, 1
      %s245 = smul.addr %s244, 8
      %s246 = smul.addr %s245, 8
      %s247 = scalar_lea.vmem %s0, %s246
      %p248 = pneg %p39
      %p249 = pneg %p36
      %p250 = pneg %p60
      %p251 = pneg %p57
      %p252 = pneg %p81
      %p253 = pneg %p78
      %p254 = pneg %p102
      %p255 = pneg %p99
      %p256 = pneg %p123
      %p257 = pneg %p120
      %p258 = pneg %p144
      %p259 = pneg %p141
      %p260 = pneg %p165
      %p261 = pneg %p162
      %p262 = pneg %p191
      %p263 = pneg %p188
      %p264 = scmp.lt.s32.totalorder %s18, 1
      %s265 = scalar_select %p264, %s18, 1
      %s266 = smul.addr %s265, 8
      %s267 = smul.addr %s266, 8
      %s268 = scalar_lea.vmem %s7, %s267
      %p269 = scmp.lt.s32.totalorder %s18, 1
      %s270 = scalar_select %p269, %s18, 1
      %s271 = smul.addr %s270, 8
      %s272 = smul.addr %s271, 8
      %s273 = scalar_lea.vmem %s0, %s272
      %p274 = scmp.lt.s32.totalorder %s18, 1
      %s275 = scalar_select %p274, %s18, 1
      %s276 = smul.addr %s275, 8
      %s277 = smul.addr %s276, 8
      %s278 = scalar_lea.vmem %s7, %s277
      %v279 = vld [vmem:[%s273] sm:$0xff]
      %v280 = vld [vmem:[%s273 + $0x8] sm:$0xff]
      %v281 = vld [vmem:[%s273 + $0x10] sm:$0xff]
      %v282 = vld [vmem:[%s273 + $0x18] sm:$0xff]
      %v283 = vld [vmem:[%s273 + $0x20] sm:$0xff]
      %v284 = vld [vmem:[%s273 + $0x28] sm:$0xff]
      %v285 = vld [vmem:[%s273 + $0x30] sm:$0xff]
      %v286 = vld [vmem:[%s273 + $0x38] sm:$0xff]
      %v287 = vpack.c.bf16 %v280, %v279
      %v288 = vpack.c.bf16 %v282, %v281
      %v289 = vpack.c.bf16 %v284, %v283
      %v290 = vpack.c.bf16 %v286, %v285
      %v291 = vld [vmem:[%s1] sm:$0xf]
      %v292 = vld [vmem:[%s1 + $0x4] sm:$0xf]
      %v293 = vld [vmem:[%s1 + $0x8] sm:$0xf]
      %v294 = vld [vmem:[%s1 + $0xc] sm:$0xf]
      %v295 = vld [vmem:[%s1 + $0x10] sm:$0xf]
      %v296 = vld [vmem:[%s1 + $0x14] sm:$0xf]
      %v297 = vld [vmem:[%s1 + $0x18] sm:$0xf]
      %v298 = vld [vmem:[%s1 + $0x1c] sm:$0xf]
      %v299 = vld [vmem:[%s1 + $0x20] sm:$0xf]
      %v300 = vld [vmem:[%s1 + $0x24] sm:$0xf]
      %v301 = vld [vmem:[%s1 + $0x28] sm:$0xf]
      %v302 = vld [vmem:[%s1 + $0x2c] sm:$0xf]
      %v303 = vld [vmem:[%s1 + $0x30] sm:$0xf]
      %v304 = vld [vmem:[%s1 + $0x34] sm:$0xf]
      %v305 = vld [vmem:[%s1 + $0x38] sm:$0xf]
      %v306 = vld [vmem:[%s1 + $0x3c] sm:$0xf]
      %v307 = vld [vmem:[%s2] sm:$0x1]
      %v309 = vperm.slane %v307, 0
      %v327 = vunpack.c.l.b16 %v291
      %v328 = vunpack.c.l.b16 %v292
      %v329 = vunpack.c.l.b16 %v293
      %v330 = vunpack.c.l.b16 %v294
      %v331 = vunpack.c.l.b16 %v295
      %v332 = vunpack.c.l.b16 %v296
      %v333 = vunpack.c.l.b16 %v297
      %v334 = vunpack.c.l.b16 %v298
      %v335 = vunpack.c.l.b16 %v299
      %v336 = vunpack.c.l.b16 %v300
      %v337 = vunpack.c.l.b16 %v301
      %v338 = vunpack.c.l.b16 %v302
      %v339 = vunpack.c.l.b16 %v303
      %v340 = vunpack.c.l.b16 %v304
      %v341 = vunpack.c.l.b16 %v305
      %v342 = vunpack.c.l.b16 %v306
      %v343 = vpack.c.b16 %v328, %v327
      %v344 = vpack.c.b16 %v330, %v329
      %v345 = vpack.c.b16 %v332, %v331
      %v346 = vpack.c.b16 %v334, %v333
      %v347 = vpack.c.b16 %v336, %v335
      %v348 = vpack.c.b16 %v338, %v337
      %v349 = vpack.c.b16 %v340, %v339
      %v350 = vpack.c.b16 %v342, %v341
      %359 = vmatpush.bf16.msra.mxu0 %v350
      %360 = vmatpush.bf16.msra.mxu0 %v349
      %361 = vmatpush.bf16.msra.mxu0 %v348
      %362 = vmatpush.bf16.msra.mxu0 %v347
      %363 = vmatpush.bf16.msra.mxu0 %v346
      %364 = vmatpush.bf16.msra.mxu0 %v345
      %365 = vmatpush.bf16.msra.mxu0 %v344
      %366 = vmatpush.bf16.msra.mxu0 %v343
      %367 = vmatmul.bf16.gmra.mxu0 %v287
      %v368 = vpop.f32.mrf.mxu0
      %v369 = vadd.f32 %v309, %v368
      %v370 = vpop.f32.mrf.mxu0
      %v371 = vadd.f32 %v309, %v370
      %372 = vmatmul.bf16.gmra.mxu0 %v288
      %v373 = vpop.f32.mrf.mxu0
      %v374 = vadd.f32 %v309, %v373
      %v375 = vpop.f32.mrf.mxu0
      %v376 = vadd.f32 %v309, %v375
      %377 = vmatmul.bf16.gmra.mxu0 %v289
      %v378 = vpop.f32.mrf.mxu0
      %v379 = vadd.f32 %v309, %v378
      %v380 = vpop.f32.mrf.mxu0
      %v381 = vadd.f32 %v309, %v380
      %382 = vmatmul.bf16.gmra.mxu0 %v290
      %v383 = vpop.f32.mrf.mxu0
      %v384 = vadd.f32 %v309, %v383
      %v385 = vpop.f32.mrf.mxu0
      %v386 = vadd.f32 %v309, %v385
      %387 = vdwg.mxu0
      %v388 = vmax.f32 %v369, 0.0
      %v389 = vmax.f32 %v371, 0.0
      %v390 = vmax.f32 %v374, 0.0
      %v391 = vmax.f32 %v376, 0.0
      %v392 = vmax.f32 %v379, 0.0
      %v393 = vmax.f32 %v381, 0.0
      %v394 = vmax.f32 %v384, 0.0
      %v395 = vmax.f32 %v386, 0.0
      %396 = vst [vmem:[#allocation2] sm:$0xff] 0.0
      %397 = vst [vmem:[#allocation2 + $0x8] sm:$0xff] 0.0
      %398 = vst [vmem:[#allocation2 + $0x10] sm:$0xff] 0.0
      %399 = vst [vmem:[#allocation2 + $0x18] sm:$0xff] 0.0
      %400 = vst [vmem:[#allocation2 + $0x20] sm:$0xff] 0.0
      %401 = vst [vmem:[#allocation2 + $0x28] sm:$0xff] 0.0
      %402 = vst [vmem:[#allocation2 + $0x30] sm:$0xff] 0.0
      %403 = vst [vmem:[#allocation2 + $0x38] sm:$0xff] 0.0
      %404 = vst [vmem:[#allocation2 + $0x40] sm:$0xff] 0.0
      %405 = vst [vmem:[#allocation2 + $0x48] sm:$0xff] 0.0
      %406 = vst [vmem:[#allocation2 + $0x50] sm:$0xff] 0.0
      %407 = vst [vmem:[#allocation2 + $0x58] sm:$0xff] 0.0
      %408 = vst [vmem:[#allocation2 + $0x60] sm:$0xff] 0.0
      %409 = vst [vmem:[#allocation2 + $0x68] sm:$0xff] 0.0
      %410 = vst [vmem:[#allocation2 + $0x70] sm:$0xff] 0.0
      %411 = vst [vmem:[#allocation2 + $0x78] sm:$0xff] 0.0
      %412 = vst [vmem:[#allocation2 + $0x80] sm:$0xff] 0.0
      %413 = vst [vmem:[#allocation2 + $0x88] sm:$0xff] 0.0
      %414 = vst [vmem:[#allocation2 + $0x90] sm:$0xff] 0.0
      %415 = vst [vmem:[#allocation2 + $0x98] sm:$0xff] 0.0
      %416 = vst [vmem:[#allocation2 + $0xa0] sm:$0xff] 0.0
      %417 = vst [vmem:[#allocation2 + $0xa8] sm:$0xff] 0.0
      %418 = vst [vmem:[#allocation2 + $0xb0] sm:$0xff] 0.0
      %419 = vst [vmem:[#allocation2 + $0xb8] sm:$0xff] 0.0
      %420 = vst [vmem:[#allocation2 + $0xc0] sm:$0xff] 0.0
      %421 = vst [vmem:[#allocation2 + $0xc8] sm:$0xff] 0.0
      %422 = vst [vmem:[#allocation2 + $0xd0] sm:$0xff] 0.0
      %423 = vst [vmem:[#allocation2 + $0xd8] sm:$0xff] 0.0
      %424 = vst [vmem:[#allocation2 + $0xe0] sm:$0xff] 0.0
      %425 = vst [vmem:[#allocation2 + $0xe8] sm:$0xff] 0.0
      %s426 = scalar_lea.vmem [#allocation2], 24
      %427 = vst [vmem:[%s426 + $0x8] sm:$0xff] %v388
      %428 = vst [vmem:[%s426 + $0x20] sm:$0xff] %v389
      %429 = vst [vmem:[%s426 + $0x38] sm:$0xff] %v390
      %430 = vst [vmem:[%s426 + $0x50] sm:$0xff] %v391
      %431 = vst [vmem:[%s426 + $0x68] sm:$0xff] %v392
      %432 = vst [vmem:[%s426 + $0x80] sm:$0xff] %v393
      %433 = vst [vmem:[%s426 + $0x98] sm:$0xff] %v394
      %434 = vst [vmem:[%s426 + $0xb0] sm:$0xff] %v395
      %v435 = vld [vmem:[#allocation2 + $0x7] sm:$0xff]
      %v436 = vld [vmem:[#allocation2 + $0x1f] sm:$0xff]
      %v437 = vld [vmem:[#allocation2 + $0x37] sm:$0xff]
      %v438 = vld [vmem:[#allocation2 + $0x4f] sm:$0xff]
      %v439 = vld [vmem:[#allocation2 + $0x67] sm:$0xff]
      %v440 = vld [vmem:[#allocation2 + $0x7f] sm:$0xff]
      %v441 = vld [vmem:[#allocation2 + $0x97] sm:$0xff]
      %v442 = vld [vmem:[#allocation2 + $0xaf] sm:$0xff]
      %v443 = vpack.c.bf16 %v436, %v435
      %v444 = vpack.c.bf16 %v438, %v437
      %v445 = vpack.c.bf16 %v440, %v439
      %v446 = vpack.c.bf16 %v442, %v441
      %v447 = vld [vmem:[%s3] sm:$0xf]
      %v448 = vld [vmem:[%s3 + $0x4] sm:$0xf]
      %v449 = vld [vmem:[%s3 + $0x8] sm:$0xf]
      %v450 = vld [vmem:[%s3 + $0xc] sm:$0xf]
      %v451 = vld [vmem:[%s3 + $0x10] sm:$0xf]
      %v452 = vld [vmem:[%s3 + $0x14] sm:$0xf]
      %v453 = vld [vmem:[%s3 + $0x18] sm:$0xf]
      %v454 = vld [vmem:[%s3 + $0x1c] sm:$0xf]
      %v455 = vld [vmem:[%s3 + $0x20] sm:$0xf]
      %v456 = vld [vmem:[%s3 + $0x24] sm:$0xf]
      %v457 = vld [vmem:[%s3 + $0x28] sm:$0xf]
      %v458 = vld [vmem:[%s3 + $0x2c] sm:$0xf]
      %v459 = vld [vmem:[%s3 + $0x30] sm:$0xf]
      %v460 = vld [vmem:[%s3 + $0x34] sm:$0xf]
      %v461 = vld [vmem:[%s3 + $0x38] sm:$0xf]
      %v462 = vld [vmem:[%s3 + $0x3c] sm:$0xf]
      %v463 = vld [vmem:[#allocation2 + $0x8] sm:$0xff]
      %v464 = vld [vmem:[#allocation2 + $0x20] sm:$0xff]
      %v465 = vld [vmem:[#allocation2 + $0x38] sm:$0xff]
      %v466 = vld [vmem:[#allocation2 + $0x50] sm:$0xff]
      %v467 = vld [vmem:[#allocation2 + $0x68] sm:$0xff]
      %v468 = vld [vmem:[#allocation2 + $0x80] sm:$0xff]
      %v469 = vld [vmem:[#allocation2 + $0x98] sm:$0xff]
      %v470 = vld [vmem:[#allocation2 + $0xb0] sm:$0xff]
      %v471 = vpack.c.bf16 %v464, %v463
      %v472 = vpack.c.bf16 %v466, %v465
      %v473 = vpack.c.bf16 %v468, %v467
      %v474 = vpack.c.bf16 %v470, %v469
      %s475 = scalar_lea.vmem %s3, 64
      %v476 = vld [vmem:[%s475] sm:$0xf]
      %v477 = vld [vmem:[%s475 + $0x4] sm:$0xf]
      %v478 = vld [vmem:[%s475 + $0x8] sm:$0xf]
      %v479 = vld [vmem:[%s475 + $0xc] sm:$0xf]
      %v480 = vld [vmem:[%s475 + $0x10] sm:$0xf]
      %v481 = vld [vmem:[%s475 + $0x14] sm:$0xf]
      %v482 = vld [vmem:[%s475 + $0x18] sm:$0xf]
      %v483 = vld [vmem:[%s475 + $0x1c] sm:$0xf]
      %v484 = vld [vmem:[%s475 + $0x20] sm:$0xf]
      %v485 = vld [vmem:[%s475 + $0x24] sm:$0xf]
      %v486 = vld [vmem:[%s475 + $0x28] sm:$0xf]
      %v487 = vld [vmem:[%s475 + $0x2c] sm:$0xf]
      %v488 = vld [vmem:[%s475 + $0x30] sm:$0xf]
      %v489 = vld [vmem:[%s475 + $0x34] sm:$0xf]
      %v490 = vld [vmem:[%s475 + $0x38] sm:$0xf]
      %v491 = vld [vmem:[%s475 + $0x3c] sm:$0xf]
      %v508 = vunpack.c.l.b16 %v476
      %v509 = vunpack.c.l.b16 %v477
      %v510 = vunpack.c.l.b16 %v478
      %v511 = vunpack.c.l.b16 %v479
      %v512 = vunpack.c.l.b16 %v480
      %v513 = vunpack.c.l.b16 %v481
      %v514 = vunpack.c.l.b16 %v482
      %v515 = vunpack.c.l.b16 %v483
      %v516 = vunpack.c.l.b16 %v484
      %v517 = vunpack.c.l.b16 %v485
      %v518 = vunpack.c.l.b16 %v486
      %v519 = vunpack.c.l.b16 %v487
      %v520 = vunpack.c.l.b16 %v488
      %v521 = vunpack.c.l.b16 %v489
      %v522 = vunpack.c.l.b16 %v490
      %v523 = vunpack.c.l.b16 %v491
      %v524 = vpack.c.b16 %v509, %v508
      %v525 = vpack.c.b16 %v511, %v510
      %v526 = vpack.c.b16 %v513, %v512
      %v527 = vpack.c.b16 %v515, %v514
      %v528 = vpack.c.b16 %v517, %v516
      %v529 = vpack.c.b16 %v519, %v518
      %v530 = vpack.c.b16 %v521, %v520
      %v531 = vpack.c.b16 %v523, %v522
      %540 = vmatpush.bf16.msra.mxu0 %v531
      %541 = vmatpush.bf16.msra.mxu0 %v530
      %542 = vmatpush.bf16.msra.mxu0 %v529
      %543 = vmatpush.bf16.msra.mxu0 %v528
      %544 = vmatpush.bf16.msra.mxu0 %v527
      %545 = vmatpush.bf16.msra.mxu0 %v526
      %546 = vmatpush.bf16.msra.mxu0 %v525
      %547 = vmatpush.bf16.msra.mxu0 %v524
      %548 = vmatmul.bf16.gmra.mxu0 %v471
      %v549 = vpop.f32.mrf.mxu0
      %v550 = vadd.f32 0.0, %v549
      %v551 = vpop.f32.mrf.mxu0
      %v552 = vadd.f32 0.0, %v551
      %553 = vmatmul.bf16.gmra.mxu0 %v472
      %v554 = vpop.f32.mrf.mxu0
      %v555 = vadd.f32 0.0, %v554
      %v556 = vpop.f32.mrf.mxu0
      %v557 = vadd.f32 0.0, %v556
      %558 = vmatmul.bf16.gmra.mxu0 %v473
      %v559 = vpop.f32.mrf.mxu0
      %v560 = vadd.f32 0.0, %v559
      %v561 = vpop.f32.mrf.mxu0
      %v562 = vadd.f32 0.0, %v561
      %563 = vmatmul.bf16.gmra.mxu0 %v474
      %v564 = vpop.f32.mrf.mxu0
      %v565 = vadd.f32 0.0, %v564
      %v566 = vpop.f32.mrf.mxu0
      %v567 = vadd.f32 0.0, %v566
      %568 = vdwg.mxu0
      %v585 = vunpack.c.l.b16 %v447
      %v586 = vunpack.c.l.b16 %v448
      %v587 = vunpack.c.l.b16 %v449
      %v588 = vunpack.c.l.b16 %v450
      %v589 = vunpack.c.l.b16 %v451
      %v590 = vunpack.c.l.b16 %v452
      %v591 = vunpack.c.l.b16 %v453
      %v592 = vunpack.c.l.b16 %v454
      %v593 = vunpack.c.l.b16 %v455
      %v594 = vunpack.c.l.b16 %v456
      %v595 = vunpack.c.l.b16 %v457
      %v596 = vunpack.c.l.b16 %v458
      %v597 = vunpack.c.l.b16 %v459
      %v598 = vunpack.c.l.b16 %v460
      %v599 = vunpack.c.l.b16 %v461
      %v600 = vunpack.c.l.b16 %v462
      %v601 = vpack.c.b16 %v586, %v585
      %v602 = vpack.c.b16 %v588, %v587
      %v603 = vpack.c.b16 %v590, %v589
      %v604 = vpack.c.b16 %v592, %v591
      %v605 = vpack.c.b16 %v594, %v593
      %v606 = vpack.c.b16 %v596, %v595
      %v607 = vpack.c.b16 %v598, %v597
      %v608 = vpack.c.b16 %v600, %v599
      %617 = vmatpush.bf16.msra.mxu0 %v608
      %618 = vmatpush.bf16.msra.mxu0 %v607
      %619 = vmatpush.bf16.msra.mxu0 %v606
      %620 = vmatpush.bf16.msra.mxu0 %v605
      %621 = vmatpush.bf16.msra.mxu0 %v604
      %622 = vmatpush.bf16.msra.mxu0 %v603
      %623 = vmatpush.bf16.msra.mxu0 %v602
      %624 = vmatpush.bf16.msra.mxu0 %v601
      %625 = vmatmul.bf16.gmra.mxu0 %v443
      %v626 = vpop.f32.mrf.mxu0
      %v627 = vadd.f32 %v550, %v626
      %v628 = vpop.f32.mrf.mxu0
      %v629 = vadd.f32 %v552, %v628
      %630 = vmatmul.bf16.gmra.mxu0 %v444
      %v631 = vpop.f32.mrf.mxu0
      %v632 = vadd.f32 %v555, %v631
      %v633 = vpop.f32.mrf.mxu0
      %v634 = vadd.f32 %v557, %v633
      %635 = vmatmul.bf16.gmra.mxu0 %v445
      %v636 = vpop.f32.mrf.mxu0
      %v637 = vadd.f32 %v560, %v636
      %v638 = vpop.f32.mrf.mxu0
      %v639 = vadd.f32 %v562, %v638
      %640 = vmatmul.bf16.gmra.mxu0 %v446
      %v641 = vpop.f32.mrf.mxu0
      %v642 = vadd.f32 %v565, %v641
      %v643 = vpop.f32.mrf.mxu0
      %v644 = vadd.f32 %v567, %v643
      %645 = vdwg.mxu0
      %v646 = vld [vmem:[#allocation2 + $0x9] sm:$0xff]
      %v647 = vld [vmem:[#allocation2 + $0x21] sm:$0xff]
      %v648 = vld [vmem:[#allocation2 + $0x39] sm:$0xff]
      %v649 = vld [vmem:[#allocation2 + $0x51] sm:$0xff]
      %v650 = vld [vmem:[#allocation2 + $0x69] sm:$0xff]
      %v651 = vld [vmem:[#allocation2 + $0x81] sm:$0xff]
      %v652 = vld [vmem:[#allocation2 + $0x99] sm:$0xff]
      %v653 = vld [vmem:[#allocation2 + $0xb1] sm:$0xff]
      %v654 = vpack.c.bf16 %v647, %v646
      %v655 = vpack.c.bf16 %v649, %v648
      %v656 = vpack.c.bf16 %v651, %v650
      %v657 = vpack.c.bf16 %v653, %v652
      %s658 = scalar_lea.vmem %s3, 128
      %v659 = vld [vmem:[%s658] sm:$0xf]
      %v660 = vld [vmem:[%s658 + $0x4] sm:$0xf]
      %v661 = vld [vmem:[%s658 + $0x8] sm:$0xf]
      %v662 = vld [vmem:[%s658 + $0xc] sm:$0xf]
      %v663 = vld [vmem:[%s658 + $0x10] sm:$0xf]
      %v664 = vld [vmem:[%s658 + $0x14] sm:$0xf]
      %v665 = vld [vmem:[%s658 + $0x18] sm:$0xf]
      %v666 = vld [vmem:[%s658 + $0x1c] sm:$0xf]
      %v667 = vld [vmem:[%s658 + $0x20] sm:$0xf]
      %v668 = vld [vmem:[%s658 + $0x24] sm:$0xf]
      %v669 = vld [vmem:[%s658 + $0x28] sm:$0xf]
      %v670 = vld [vmem:[%s658 + $0x2c] sm:$0xf]
      %v671 = vld [vmem:[%s658 + $0x30] sm:$0xf]
      %v672 = vld [vmem:[%s658 + $0x34] sm:$0xf]
      %v673 = vld [vmem:[%s658 + $0x38] sm:$0xf]
      %v674 = vld [vmem:[%s658 + $0x3c] sm:$0xf]
      %v691 = vunpack.c.l.b16 %v659
      %v692 = vunpack.c.l.b16 %v660
      %v693 = vunpack.c.l.b16 %v661
      %v694 = vunpack.c.l.b16 %v662
      %v695 = vunpack.c.l.b16 %v663
      %v696 = vunpack.c.l.b16 %v664
      %v697 = vunpack.c.l.b16 %v665
      %v698 = vunpack.c.l.b16 %v666
      %v699 = vunpack.c.l.b16 %v667
      %v700 = vunpack.c.l.b16 %v668
      %v701 = vunpack.c.l.b16 %v669
      %v702 = vunpack.c.l.b16 %v670
      %v703 = vunpack.c.l.b16 %v671
      %v704 = vunpack.c.l.b16 %v672
      %v705 = vunpack.c.l.b16 %v673
      %v706 = vunpack.c.l.b16 %v674
      %v707 = vpack.c.b16 %v692, %v691
      %v708 = vpack.c.b16 %v694, %v693
      %v709 = vpack.c.b16 %v696, %v695
      %v710 = vpack.c.b16 %v698, %v697
      %v711 = vpack.c.b16 %v700, %v699
      %v712 = vpack.c.b16 %v702, %v701
      %v713 = vpack.c.b16 %v704, %v703
      %v714 = vpack.c.b16 %v706, %v705
      %723 = vmatpush.bf16.msra.mxu0 %v714
      %724 = vmatpush.bf16.msra.mxu0 %v713
      %725 = vmatpush.bf16.msra.mxu0 %v712
      %726 = vmatpush.bf16.msra.mxu0 %v711
      %727 = vmatpush.bf16.msra.mxu0 %v710
      %728 = vmatpush.bf16.msra.mxu0 %v709
      %729 = vmatpush.bf16.msra.mxu0 %v708
      %730 = vmatpush.bf16.msra.mxu0 %v707
      %731 = vmatmul.bf16.gmra.mxu0 %v654
      %v732 = vpop.f32.mrf.mxu0
      %v733 = vadd.f32 0.0, %v732
      %v734 = vpop.f32.mrf.mxu0
      %v735 = vadd.f32 0.0, %v734
      %736 = vmatmul.bf16.gmra.mxu0 %v655
      %v737 = vpop.f32.mrf.mxu0
      %v738 = vadd.f32 0.0, %v737
      %v739 = vpop.f32.mrf.mxu0
      %v740 = vadd.f32 0.0, %v739
      %741 = vmatmul.bf16.gmra.mxu0 %v656
      %v742 = vpop.f32.mrf.mxu0
      %v743 = vadd.f32 0.0, %v742
      %v744 = vpop.f32.mrf.mxu0
      %v745 = vadd.f32 0.0, %v744
      %746 = vmatmul.bf16.gmra.mxu0 %v657
      %v747 = vpop.f32.mrf.mxu0
      %v748 = vadd.f32 0.0, %v747
      %v749 = vpop.f32.mrf.mxu0
      %v750 = vadd.f32 0.0, %v749
      %751 = vdwg.mxu0
      %v752 = vadd.f32 %v627, %v733
      %v753 = vadd.f32 %v629, %v735
      %v754 = vadd.f32 %v632, %v738
      %v755 = vadd.f32 %v634, %v740
      %v756 = vadd.f32 %v637, %v743
      %v757 = vadd.f32 %v639, %v745
      %v758 = vadd.f32 %v642, %v748
      %v759 = vadd.f32 %v644, %v750
      %v760 = vld [vmem:[%s426 + $0x7] sm:$0xff]
      %v761 = vld [vmem:[%s426 + $0x1f] sm:$0xff]
      %v762 = vld [vmem:[%s426 + $0x37] sm:$0xff]
      %v763 = vld [vmem:[%s426 + $0x4f] sm:$0xff]
      %v764 = vld [vmem:[%s426 + $0x67] sm:$0xff]
      %v765 = vld [vmem:[%s426 + $0x7f] sm:$0xff]
      %v766 = vld [vmem:[%s426 + $0x97] sm:$0xff]
      %v767 = vld [vmem:[%s426 + $0xaf] sm:$0xff]
      %v768 = vpack.c.bf16 %v761, %v760
      %v769 = vpack.c.bf16 %v763, %v762
      %v770 = vpack.c.bf16 %v765, %v764
      %v771 = vpack.c.bf16 %v767, %v766
      %s772 = scalar_lea.vmem %s3, 192
      %v773 = vld [vmem:[%s772] sm:$0xf]
      %v774 = vld [vmem:[%s772 + $0x4] sm:$0xf]
      %v775 = vld [vmem:[%s772 + $0x8] sm:$0xf]
      %v776 = vld [vmem:[%s772 + $0xc] sm:$0xf]
      %v777 = vld [vmem:[%s772 + $0x10] sm:$0xf]
      %v778 = vld [vmem:[%s772 + $0x14] sm:$0xf]
      %v779 = vld [vmem:[%s772 + $0x18] sm:$0xf]
      %v780 = vld [vmem:[%s772 + $0x1c] sm:$0xf]
      %v781 = vld [vmem:[%s772 + $0x20] sm:$0xf]
      %v782 = vld [vmem:[%s772 + $0x24] sm:$0xf]
      %v783 = vld [vmem:[%s772 + $0x28] sm:$0xf]
      %v784 = vld [vmem:[%s772 + $0x2c] sm:$0xf]
      %v785 = vld [vmem:[%s772 + $0x30] sm:$0xf]
      %v786 = vld [vmem:[%s772 + $0x34] sm:$0xf]
      %v787 = vld [vmem:[%s772 + $0x38] sm:$0xf]
      %v788 = vld [vmem:[%s772 + $0x3c] sm:$0xf]
      %v805 = vunpack.c.l.b16 %v773
      %v806 = vunpack.c.l.b16 %v774
      %v807 = vunpack.c.l.b16 %v775
      %v808 = vunpack.c.l.b16 %v776
      %v809 = vunpack.c.l.b16 %v777
      %v810 = vunpack.c.l.b16 %v778
      %v811 = vunpack.c.l.b16 %v779
      %v812 = vunpack.c.l.b16 %v780
      %v813 = vunpack.c.l.b16 %v781
      %v814 = vunpack.c.l.b16 %v782
      %v815 = vunpack.c.l.b16 %v783
      %v816 = vunpack.c.l.b16 %v784
      %v817 = vunpack.c.l.b16 %v785
      %v818 = vunpack.c.l.b16 %v786
      %v819 = vunpack.c.l.b16 %v787
      %v820 = vunpack.c.l.b16 %v788
      %v821 = vpack.c.b16 %v806, %v805
      %v822 = vpack.c.b16 %v808, %v807
      %v823 = vpack.c.b16 %v810, %v809
      %v824 = vpack.c.b16 %v812, %v811
      %v825 = vpack.c.b16 %v814, %v813
      %v826 = vpack.c.b16 %v816, %v815
      %v827 = vpack.c.b16 %v818, %v817
      %v828 = vpack.c.b16 %v820, %v819
      %837 = vmatpush.bf16.msra.mxu0 %v828
      %838 = vmatpush.bf16.msra.mxu0 %v827
      %839 = vmatpush.bf16.msra.mxu0 %v826
      %840 = vmatpush.bf16.msra.mxu0 %v825
      %841 = vmatpush.bf16.msra.mxu0 %v824
      %842 = vmatpush.bf16.msra.mxu0 %v823
      %843 = vmatpush.bf16.msra.mxu0 %v822
      %844 = vmatpush.bf16.msra.mxu0 %v821
      %845 = vmatmul.bf16.gmra.mxu0 %v768
      %v846 = vpop.f32.mrf.mxu0
      %v847 = vadd.f32 0.0, %v846
      %v848 = vpop.f32.mrf.mxu0
      %v849 = vadd.f32 0.0, %v848
      %850 = vmatmul.bf16.gmra.mxu0 %v769
      %v851 = vpop.f32.mrf.mxu0
      %v852 = vadd.f32 0.0, %v851
      %v853 = vpop.f32.mrf.mxu0
      %v854 = vadd.f32 0.0, %v853
      %855 = vmatmul.bf16.gmra.mxu0 %v770
      %v856 = vpop.f32.mrf.mxu0
      %v857 = vadd.f32 0.0, %v856
      %v858 = vpop.f32.mrf.mxu0
      %v859 = vadd.f32 0.0, %v858
      %860 = vmatmul.bf16.gmra.mxu0 %v771
      %v861 = vpop.f32.mrf.mxu0
      %v862 = vadd.f32 0.0, %v861
      %v863 = vpop.f32.mrf.mxu0
      %v864 = vadd.f32 0.0, %v863
      %865 = vdwg.mxu0
      %v866 = vadd.f32 %v752, %v847
      %v867 = vadd.f32 %v753, %v849
      %v868 = vadd.f32 %v754, %v852
      %v869 = vadd.f32 %v755, %v854
      %v870 = vadd.f32 %v756, %v857
      %v871 = vadd.f32 %v757, %v859
      %v872 = vadd.f32 %v758, %v862
      %v873 = vadd.f32 %v759, %v864
      %v874 = vld [vmem:[%s426 + $0x8] sm:$0xff]
      %v875 = vld [vmem:[%s426 + $0x20] sm:$0xff]
      %v876 = vld [vmem:[%s426 + $0x38] sm:$0xff]
      %v877 = vld [vmem:[%s426 + $0x50] sm:$0xff]
      %v878 = vld [vmem:[%s426 + $0x68] sm:$0xff]
      %v879 = vld [vmem:[%s426 + $0x80] sm:$0xff]
      %v880 = vld [vmem:[%s426 + $0x98] sm:$0xff]
      %v881 = vld [vmem:[%s426 + $0xb0] sm:$0xff]
      %v882 = vpack.c.bf16 %v875, %v874
      %v883 = vpack.c.bf16 %v877, %v876
      %v884 = vpack.c.bf16 %v879, %v878
      %v885 = vpack.c.bf16 %v881, %v880
      %s886 = scalar_lea.vmem %s3, 256
      %v887 = vld [vmem:[%s886] sm:$0xf]
      %v888 = vld [vmem:[%s886 + $0x4] sm:$0xf]
      %v889 = vld [vmem:[%s886 + $0x8] sm:$0xf]
      %v890 = vld [vmem:[%s886 + $0xc] sm:$0xf]
      %v891 = vld [vmem:[%s886 + $0x10] sm:$0xf]
      %v892 = vld [vmem:[%s886 + $0x14] sm:$0xf]
      %v893 = vld [vmem:[%s886 + $0x18] sm:$0xf]
      %v894 = vld [vmem:[%s886 + $0x1c] sm:$0xf]
      %v895 = vld [vmem:[%s886 + $0x20] sm:$0xf]
      %v896 = vld [vmem:[%s886 + $0x24] sm:$0xf]
      %v897 = vld [vmem:[%s886 + $0x28] sm:$0xf]
      %v898 = vld [vmem:[%s886 + $0x2c] sm:$0xf]
      %v899 = vld [vmem:[%s886 + $0x30] sm:$0xf]
      %v900 = vld [vmem:[%s886 + $0x34] sm:$0xf]
      %v901 = vld [vmem:[%s886 + $0x38] sm:$0xf]
      %v902 = vld [vmem:[%s886 + $0x3c] sm:$0xf]
      %v919 = vunpack.c.l.b16 %v887
      %v920 = vunpack.c.l.b16 %v888
      %v921 = vunpack.c.l.b16 %v889
      %v922 = vunpack.c.l.b16 %v890
      %v923 = vunpack.c.l.b16 %v891
      %v924 = vunpack.c.l.b16 %v892
      %v925 = vunpack.c.l.b16 %v893
      %v926 = vunpack.c.l.b16 %v894
      %v927 = vunpack.c.l.b16 %v895
      %v928 = vunpack.c.l.b16 %v896
      %v929 = vunpack.c.l.b16 %v897
      %v930 = vunpack.c.l.b16 %v898
      %v931 = vunpack.c.l.b16 %v899
      %v932 = vunpack.c.l.b16 %v900
      %v933 = vunpack.c.l.b16 %v901
      %v934 = vunpack.c.l.b16 %v902
      %v935 = vpack.c.b16 %v920, %v919
      %v936 = vpack.c.b16 %v922, %v921
      %v937 = vpack.c.b16 %v924, %v923
      %v938 = vpack.c.b16 %v926, %v925
      %v939 = vpack.c.b16 %v928, %v927
      %v940 = vpack.c.b16 %v930, %v929
      %v941 = vpack.c.b16 %v932, %v931
      %v942 = vpack.c.b16 %v934, %v933
      %951 = vmatpush.bf16.msra.mxu0 %v942
      %952 = vmatpush.bf16.msra.mxu0 %v941
      %953 = vmatpush.bf16.msra.mxu0 %v940
      %954 = vmatpush.bf16.msra.mxu0 %v939
      %955 = vmatpush.bf16.msra.mxu0 %v938
      %956 = vmatpush.bf16.msra.mxu0 %v937
      %957 = vmatpush.bf16.msra.mxu0 %v936
      %958 = vmatpush.bf16.msra.mxu0 %v935
      %959 = vmatmul.bf16.gmra.mxu0 %v882
      %v960 = vpop.f32.mrf.mxu0
      %v961 = vadd.f32 0.0, %v960
      %v962 = vpop.f32.mrf.mxu0
      %v963 = vadd.f32 0.0, %v962
      %964 = vmatmul.bf16.gmra.mxu0 %v883
      %v965 = vpop.f32.mrf.mxu0
      %v966 = vadd.f32 0.0, %v965
      %v967 = vpop.f32.mrf.mxu0
      %v968 = vadd.f32 0.0, %v967
      %969 = vmatmul.bf16.gmra.mxu0 %v884
      %v970 = vpop.f32.mrf.mxu0
      %v971 = vadd.f32 0.0, %v970
      %v972 = vpop.f32.mrf.mxu0
      %v973 = vadd.f32 0.0, %v972
      %974 = vmatmul.bf16.gmra.mxu0 %v885
      %v975 = vpop.f32.mrf.mxu0
      %v976 = vadd.f32 0.0, %v975
      %v977 = vpop.f32.mrf.mxu0
      %v978 = vadd.f32 0.0, %v977
      %979 = vdwg.mxu0
      %v980 = vadd.f32 %v866, %v961
      %v981 = vadd.f32 %v867, %v963
      %v982 = vadd.f32 %v868, %v966
      %v983 = vadd.f32 %v869, %v968
      %v984 = vadd.f32 %v870, %v971
      %v985 = vadd.f32 %v871, %v973
      %v986 = vadd.f32 %v872, %v976
      %v987 = vadd.f32 %v873, %v978
      %v988 = vld [vmem:[%s426 + $0x9] sm:$0xff]
      %v989 = vld [vmem:[%s426 + $0x21] sm:$0xff]
      %v990 = vld [vmem:[%s426 + $0x39] sm:$0xff]
      %v991 = vld [vmem:[%s426 + $0x51] sm:$0xff]
      %v992 = vld [vmem:[%s426 + $0x69] sm:$0xff]
      %v993 = vld [vmem:[%s426 + $0x81] sm:$0xff]
      %v994 = vld [vmem:[%s426 + $0x99] sm:$0xff]
      %v995 = vld [vmem:[%s426 + $0xb1] sm:$0xff]
      %v996 = vpack.c.bf16 %v989, %v988
      %v997 = vpack.c.bf16 %v991, %v990
      %v998 = vpack.c.bf16 %v993, %v992
      %v999 = vpack.c.bf16 %v995, %v994
      %s1000 = scalar_lea.vmem %s3, 320
      %v1001 = vld [vmem:[%s1000] sm:$0xf]
      %v1002 = vld [vmem:[%s1000 + $0x4] sm:$0xf]
      %v1003 = vld [vmem:[%s1000 + $0x8] sm:$0xf]
      %v1004 = vld [vmem:[%s1000 + $0xc] sm:$0xf]
      %v1005 = vld [vmem:[%s1000 + $0x10] sm:$0xf]
      %v1006 = vld [vmem:[%s1000 + $0x14] sm:$0xf]
      %v1007 = vld [vmem:[%s1000 + $0x18] sm:$0xf]
      %v1008 = vld [vmem:[%s1000 + $0x1c] sm:$0xf]
      %v1009 = vld [vmem:[%s1000 + $0x20] sm:$0xf]
      %v1010 = vld [vmem:[%s1000 + $0x24] sm:$0xf]
      %v1011 = vld [vmem:[%s1000 + $0x28] sm:$0xf]
      %v1012 = vld [vmem:[%s1000 + $0x2c] sm:$0xf]
      %v1013 = vld [vmem:[%s1000 + $0x30] sm:$0xf]
      %v1014 = vld [vmem:[%s1000 + $0x34] sm:$0xf]
      %v1015 = vld [vmem:[%s1000 + $0x38] sm:$0xf]
      %v1016 = vld [vmem:[%s1000 + $0x3c] sm:$0xf]
      %v1033 = vunpack.c.l.b16 %v1001
      %v1034 = vunpack.c.l.b16 %v1002
      %v1035 = vunpack.c.l.b16 %v1003
      %v1036 = vunpack.c.l.b16 %v1004
      %v1037 = vunpack.c.l.b16 %v1005
      %v1038 = vunpack.c.l.b16 %v1006
      %v1039 = vunpack.c.l.b16 %v1007
      %v1040 = vunpack.c.l.b16 %v1008
      %v1041 = vunpack.c.l.b16 %v1009
      %v1042 = vunpack.c.l.b16 %v1010
      %v1043 = vunpack.c.l.b16 %v1011
      %v1044 = vunpack.c.l.b16 %v1012
      %v1045 = vunpack.c.l.b16 %v1013
      %v1046 = vunpack.c.l.b16 %v1014
      %v1047 = vunpack.c.l.b16 %v1015
      %v1048 = vunpack.c.l.b16 %v1016
      %v1049 = vpack.c.b16 %v1034, %v1033
      %v1050 = vpack.c.b16 %v1036, %v1035
      %v1051 = vpack.c.b16 %v1038, %v1037
      %v1052 = vpack.c.b16 %v1040, %v1039
      %v1053 = vpack.c.b16 %v1042, %v1041
      %v1054 = vpack.c.b16 %v1044, %v1043
      %v1055 = vpack.c.b16 %v1046, %v1045
      %v1056 = vpack.c.b16 %v1048, %v1047
      %1065 = vmatpush.bf16.msra.mxu0 %v1056
      %1066 = vmatpush.bf16.msra.mxu0 %v1055
      %1067 = vmatpush.bf16.msra.mxu0 %v1054
      %1068 = vmatpush.bf16.msra.mxu0 %v1053
      %1069 = vmatpush.bf16.msra.mxu0 %v1052
      %1070 = vmatpush.bf16.msra.mxu0 %v1051
      %1071 = vmatpush.bf16.msra.mxu0 %v1050
      %1072 = vmatpush.bf16.msra.mxu0 %v1049
      %1073 = vmatmul.bf16.gmra.mxu0 %v996
      %v1074 = vpop.f32.mrf.mxu0
      %v1075 = vadd.f32 0.0, %v1074
      %v1076 = vpop.f32.mrf.mxu0
      %v1077 = vadd.f32 0.0, %v1076
      %1078 = vmatmul.bf16.gmra.mxu0 %v997
      %v1079 = vpop.f32.mrf.mxu0
      %v1080 = vadd.f32 0.0, %v1079
      %v1081 = vpop.f32.mrf.mxu0
      %v1082 = vadd.f32 0.0, %v1081
      %1083 = vmatmul.bf16.gmra.mxu0 %v998
      %v1084 = vpop.f32.mrf.mxu0
      %v1085 = vadd.f32 0.0, %v1084
      %v1086 = vpop.f32.mrf.mxu0
      %v1087 = vadd.f32 0.0, %v1086
      %1088 = vmatmul.bf16.gmra.mxu0 %v999
      %v1089 = vpop.f32.mrf.mxu0
      %v1090 = vadd.f32 0.0, %v1089
      %v1091 = vpop.f32.mrf.mxu0
      %v1092 = vadd.f32 0.0, %v1091
      %1093 = vdwg.mxu0
      %v1094 = vadd.f32 %v980, %v1075
      %v1095 = vadd.f32 %v981, %v1077
      %v1096 = vadd.f32 %v982, %v1080
      %v1097 = vadd.f32 %v983, %v1082
      %v1098 = vadd.f32 %v984, %v1085
      %v1099 = vadd.f32 %v985, %v1087
      %v1100 = vadd.f32 %v986, %v1090
      %v1101 = vadd.f32 %v987, %v1092
      %s1102 = scalar_lea.vmem [#allocation2], 48
      %v1103 = vld [vmem:[%s1102 + $0x7] sm:$0xff]
      %v1104 = vld [vmem:[%s1102 + $0x1f] sm:$0xff]
      %v1105 = vld [vmem:[%s1102 + $0x37] sm:$0xff]
      %v1106 = vld [vmem:[%s1102 + $0x4f] sm:$0xff]
      %v1107 = vld [vmem:[%s1102 + $0x67] sm:$0xff]
      %v1108 = vld [vmem:[%s1102 + $0x7f] sm:$0xff]
      %v1109 = vld [vmem:[%s1102 + $0x97] sm:$0xff]
      %v1110 = vld [vmem:[%s1102 + $0xaf] sm:$0xff]
      %v1111 = vpack.c.bf16 %v1104, %v1103
      %v1112 = vpack.c.bf16 %v1106, %v1105
      %v1113 = vpack.c.bf16 %v1108, %v1107
      %v1114 = vpack.c.bf16 %v1110, %v1109
      %s1115 = scalar_lea.vmem %s3, 384
      %v1116 = vld [vmem:[%s1115] sm:$0xf]
      %v1117 = vld [vmem:[%s1115 + $0x4] sm:$0xf]
      %v1118 = vld [vmem:[%s1115 + $0x8] sm:$0xf]
      %v1119 = vld [vmem:[%s1115 + $0xc] sm:$0xf]
      %v1120 = vld [vmem:[%s1115 + $0x10] sm:$0xf]
      %v1121 = vld [vmem:[%s1115 + $0x14] sm:$0xf]
      %v1122 = vld [vmem:[%s1115 + $0x18] sm:$0xf]
      %v1123 = vld [vmem:[%s1115 + $0x1c] sm:$0xf]
      %v1124 = vld [vmem:[%s1115 + $0x20] sm:$0xf]
      %v1125 = vld [vmem:[%s1115 + $0x24] sm:$0xf]
      %v1126 = vld [vmem:[%s1115 + $0x28] sm:$0xf]
      %v1127 = vld [vmem:[%s1115 + $0x2c] sm:$0xf]
      %v1128 = vld [vmem:[%s1115 + $0x30] sm:$0xf]
      %v1129 = vld [vmem:[%s1115 + $0x34] sm:$0xf]
      %v1130 = vld [vmem:[%s1115 + $0x38] sm:$0xf]
      %v1131 = vld [vmem:[%s1115 + $0x3c] sm:$0xf]
      %v1148 = vunpack.c.l.b16 %v1116
      %v1149 = vunpack.c.l.b16 %v1117
      %v1150 = vunpack.c.l.b16 %v1118
      %v1151 = vunpack.c.l.b16 %v1119
      %v1152 = vunpack.c.l.b16 %v1120
      %v1153 = vunpack.c.l.b16 %v1121
      %v1154 = vunpack.c.l.b16 %v1122
      %v1155 = vunpack.c.l.b16 %v1123
      %v1156 = vunpack.c.l.b16 %v1124
      %v1157 = vunpack.c.l.b16 %v1125
      %v1158 = vunpack.c.l.b16 %v1126
      %v1159 = vunpack.c.l.b16 %v1127
      %v1160 = vunpack.c.l.b16 %v1128
      %v1161 = vunpack.c.l.b16 %v1129
      %v1162 = vunpack.c.l.b16 %v1130
      %v1163 = vunpack.c.l.b16 %v1131
      %v1164 = vpack.c.b16 %v1149, %v1148
      %v1165 = vpack.c.b16 %v1151, %v1150
      %v1166 = vpack.c.b16 %v1153, %v1152
      %v1167 = vpack.c.b16 %v1155, %v1154
      %v1168 = vpack.c.b16 %v1157, %v1156
      %v1169 = vpack.c.b16 %v1159, %v1158
      %v1170 = vpack.c.b16 %v1161, %v1160
      %v1171 = vpack.c.b16 %v1163, %v1162
      %1180 = vmatpush.bf16.msra.mxu0 %v1171
      %1181 = vmatpush.bf16.msra.mxu0 %v1170
      %1182 = vmatpush.bf16.msra.mxu0 %v1169
      %1183 = vmatpush.bf16.msra.mxu0 %v1168
      %1184 = vmatpush.bf16.msra.mxu0 %v1167
      %1185 = vmatpush.bf16.msra.mxu0 %v1166
      %1186 = vmatpush.bf16.msra.mxu0 %v1165
      %1187 = vmatpush.bf16.msra.mxu0 %v1164
      %1188 = vmatmul.bf16.gmra.mxu0 %v1111
      %v1189 = vpop.f32.mrf.mxu0
      %v1190 = vadd.f32 0.0, %v1189
      %v1191 = vpop.f32.mrf.mxu0
      %v1192 = vadd.f32 0.0, %v1191
      %1193 = vmatmul.bf16.gmra.mxu0 %v1112
      %v1194 = vpop.f32.mrf.mxu0
      %v1195 = vadd.f32 0.0, %v1194
      %v1196 = vpop.f32.mrf.mxu0
      %v1197 = vadd.f32 0.0, %v1196
      %1198 = vmatmul.bf16.gmra.mxu0 %v1113
      %v1199 = vpop.f32.mrf.mxu0
      %v1200 = vadd.f32 0.0, %v1199
      %v1201 = vpop.f32.mrf.mxu0
      %v1202 = vadd.f32 0.0, %v1201
      %1203 = vmatmul.bf16.gmra.mxu0 %v1114
      %v1204 = vpop.f32.mrf.mxu0
      %v1205 = vadd.f32 0.0, %v1204
      %v1206 = vpop.f32.mrf.mxu0
      %v1207 = vadd.f32 0.0, %v1206
      %1208 = vdwg.mxu0
      %v1209 = vadd.f32 %v1094, %v1190
      %v1210 = vadd.f32 %v1095, %v1192
      %v1211 = vadd.f32 %v1096, %v1195
      %v1212 = vadd.f32 %v1097, %v1197
      %v1213 = vadd.f32 %v1098, %v1200
      %v1214 = vadd.f32 %v1099, %v1202
      %v1215 = vadd.f32 %v1100, %v1205
      %v1216 = vadd.f32 %v1101, %v1207
      %v1217 = vld [vmem:[%s1102 + $0x8] sm:$0xff]
      %v1218 = vld [vmem:[%s1102 + $0x20] sm:$0xff]
      %v1219 = vld [vmem:[%s1102 + $0x38] sm:$0xff]
      %v1220 = vld [vmem:[%s1102 + $0x50] sm:$0xff]
      %v1221 = vld [vmem:[%s1102 + $0x68] sm:$0xff]
      %v1222 = vld [vmem:[%s1102 + $0x80] sm:$0xff]
      %v1223 = vld [vmem:[%s1102 + $0x98] sm:$0xff]
      %v1224 = vld [vmem:[%s1102 + $0xb0] sm:$0xff]
      %v1225 = vpack.c.bf16 %v1218, %v1217
      %v1226 = vpack.c.bf16 %v1220, %v1219
      %v1227 = vpack.c.bf16 %v1222, %v1221
      %v1228 = vpack.c.bf16 %v1224, %v1223
      %s1229 = scalar_lea.vmem %s3, 448
      %v1230 = vld [vmem:[%s1229] sm:$0xf]
      %v1231 = vld [vmem:[%s1229 + $0x4] sm:$0xf]
      %v1232 = vld [vmem:[%s1229 + $0x8] sm:$0xf]
      %v1233 = vld [vmem:[%s1229 + $0xc] sm:$0xf]
      %v1234 = vld [vmem:[%s1229 + $0x10] sm:$0xf]
      %v1235 = vld [vmem:[%s1229 + $0x14] sm:$0xf]
      %v1236 = vld [vmem:[%s1229 + $0x18] sm:$0xf]
      %v1237 = vld [vmem:[%s1229 + $0x1c] sm:$0xf]
      %v1238 = vld [vmem:[%s1229 + $0x20] sm:$0xf]
      %v1239 = vld [vmem:[%s1229 + $0x24] sm:$0xf]
      %v1240 = vld [vmem:[%s1229 + $0x28] sm:$0xf]
      %v1241 = vld [vmem:[%s1229 + $0x2c] sm:$0xf]
      %v1242 = vld [vmem:[%s1229 + $0x30] sm:$0xf]
      %v1243 = vld [vmem:[%s1229 + $0x34] sm:$0xf]
      %v1244 = vld [vmem:[%s1229 + $0x38] sm:$0xf]
      %v1245 = vld [vmem:[%s1229 + $0x3c] sm:$0xf]
      %v1262 = vunpack.c.l.b16 %v1230
      %v1263 = vunpack.c.l.b16 %v1231
      %v1264 = vunpack.c.l.b16 %v1232
      %v1265 = vunpack.c.l.b16 %v1233
      %v1266 = vunpack.c.l.b16 %v1234
      %v1267 = vunpack.c.l.b16 %v1235
      %v1268 = vunpack.c.l.b16 %v1236
      %v1269 = vunpack.c.l.b16 %v1237
      %v1270 = vunpack.c.l.b16 %v1238
      %v1271 = vunpack.c.l.b16 %v1239
      %v1272 = vunpack.c.l.b16 %v1240
      %v1273 = vunpack.c.l.b16 %v1241
      %v1274 = vunpack.c.l.b16 %v1242
      %v1275 = vunpack.c.l.b16 %v1243
      %v1276 = vunpack.c.l.b16 %v1244
      %v1277 = vunpack.c.l.b16 %v1245
      %v1278 = vpack.c.b16 %v1263, %v1262
      %v1279 = vpack.c.b16 %v1265, %v1264
      %v1280 = vpack.c.b16 %v1267, %v1266
      %v1281 = vpack.c.b16 %v1269, %v1268
      %v1282 = vpack.c.b16 %v1271, %v1270
      %v1283 = vpack.c.b16 %v1273, %v1272
      %v1284 = vpack.c.b16 %v1275, %v1274
      %v1285 = vpack.c.b16 %v1277, %v1276
      %1294 = vmatpush.bf16.msra.mxu0 %v1285
      %1295 = vmatpush.bf16.msra.mxu0 %v1284
      %1296 = vmatpush.bf16.msra.mxu0 %v1283
      %1297 = vmatpush.bf16.msra.mxu0 %v1282
      %1298 = vmatpush.bf16.msra.mxu0 %v1281
      %1299 = vmatpush.bf16.msra.mxu0 %v1280
      %1300 = vmatpush.bf16.msra.mxu0 %v1279
      %1301 = vmatpush.bf16.msra.mxu0 %v1278
      %1302 = vmatmul.bf16.gmra.mxu0 %v1225
      %v1303 = vpop.f32.mrf.mxu0
      %v1304 = vadd.f32 0.0, %v1303
      %v1305 = vpop.f32.mrf.mxu0
      %v1306 = vadd.f32 0.0, %v1305
      %1307 = vmatmul.bf16.gmra.mxu0 %v1226
      %v1308 = vpop.f32.mrf.mxu0
      %v1309 = vadd.f32 0.0, %v1308
      %v1310 = vpop.f32.mrf.mxu0
      %v1311 = vadd.f32 0.0, %v1310
      %1312 = vmatmul.bf16.gmra.mxu0 %v1227
      %v1313 = vpop.f32.mrf.mxu0
      %v1314 = vadd.f32 0.0, %v1313
      %v1315 = vpop.f32.mrf.mxu0
      %v1316 = vadd.f32 0.0, %v1315
      %1317 = vmatmul.bf16.gmra.mxu0 %v1228
      %v1318 = vpop.f32.mrf.mxu0
      %v1319 = vadd.f32 0.0, %v1318
      %v1320 = vpop.f32.mrf.mxu0
      %v1321 = vadd.f32 0.0, %v1320
      %1322 = vdwg.mxu0
      %v1323 = vadd.f32 %v1209, %v1304
      %v1324 = vadd.f32 %v1210, %v1306
      %v1325 = vadd.f32 %v1211, %v1309
      %v1326 = vadd.f32 %v1212, %v1311
      %v1327 = vadd.f32 %v1213, %v1314
      %v1328 = vadd.f32 %v1214, %v1316
      %v1329 = vadd.f32 %v1215, %v1319
      %v1330 = vadd.f32 %v1216, %v1321
      %v1331 = vld [vmem:[%s1102 + $0x9] sm:$0xff]
      %v1332 = vld [vmem:[%s1102 + $0x21] sm:$0xff]
      %v1333 = vld [vmem:[%s1102 + $0x39] sm:$0xff]
      %v1334 = vld [vmem:[%s1102 + $0x51] sm:$0xff]
      %v1335 = vld [vmem:[%s1102 + $0x69] sm:$0xff]
      %v1336 = vld [vmem:[%s1102 + $0x81] sm:$0xff]
      %v1337 = vld [vmem:[%s1102 + $0x99] sm:$0xff]
      %v1338 = vld [vmem:[%s1102 + $0xb1] sm:$0xff]
      %v1339 = vpack.c.bf16 %v1332, %v1331
      %v1340 = vpack.c.bf16 %v1334, %v1333
      %v1341 = vpack.c.bf16 %v1336, %v1335
      %v1342 = vpack.c.bf16 %v1338, %v1337
      %s1343 = scalar_lea.vmem %s3, 512
      %v1344 = vld [vmem:[%s1343] sm:$0xf]
      %v1345 = vld [vmem:[%s1343 + $0x4] sm:$0xf]
      %v1346 = vld [vmem:[%s1343 + $0x8] sm:$0xf]
      %v1347 = vld [vmem:[%s1343 + $0xc] sm:$0xf]
      %v1348 = vld [vmem:[%s1343 + $0x10] sm:$0xf]
      %v1349 = vld [vmem:[%s1343 + $0x14] sm:$0xf]
      %v1350 = vld [vmem:[%s1343 + $0x18] sm:$0xf]
      %v1351 = vld [vmem:[%s1343 + $0x1c] sm:$0xf]
      %v1352 = vld [vmem:[%s1343 + $0x20] sm:$0xf]
      %v1353 = vld [vmem:[%s1343 + $0x24] sm:$0xf]
      %v1354 = vld [vmem:[%s1343 + $0x28] sm:$0xf]
      %v1355 = vld [vmem:[%s1343 + $0x2c] sm:$0xf]
      %v1356 = vld [vmem:[%s1343 + $0x30] sm:$0xf]
      %v1357 = vld [vmem:[%s1343 + $0x34] sm:$0xf]
      %v1358 = vld [vmem:[%s1343 + $0x38] sm:$0xf]
      %v1359 = vld [vmem:[%s1343 + $0x3c] sm:$0xf]
      %v1376 = vunpack.c.l.b16 %v1344
      %v1377 = vunpack.c.l.b16 %v1345
      %v1378 = vunpack.c.l.b16 %v1346
      %v1379 = vunpack.c.l.b16 %v1347
      %v1380 = vunpack.c.l.b16 %v1348
      %v1381 = vunpack.c.l.b16 %v1349
      %v1382 = vunpack.c.l.b16 %v1350
      %v1383 = vunpack.c.l.b16 %v1351
      %v1384 = vunpack.c.l.b16 %v1352
      %v1385 = vunpack.c.l.b16 %v1353
      %v1386 = vunpack.c.l.b16 %v1354
      %v1387 = vunpack.c.l.b16 %v1355
      %v1388 = vunpack.c.l.b16 %v1356
      %v1389 = vunpack.c.l.b16 %v1357
      %v1390 = vunpack.c.l.b16 %v1358
      %v1391 = vunpack.c.l.b16 %v1359
      %v1392 = vpack.c.b16 %v1377, %v1376
      %v1393 = vpack.c.b16 %v1379, %v1378
      %v1394 = vpack.c.b16 %v1381, %v1380
      %v1395 = vpack.c.b16 %v1383, %v1382
      %v1396 = vpack.c.b16 %v1385, %v1384
      %v1397 = vpack.c.b16 %v1387, %v1386
      %v1398 = vpack.c.b16 %v1389, %v1388
      %v1399 = vpack.c.b16 %v1391, %v1390
      %1408 = vmatpush.bf16.msra.mxu0 %v1399
      %1409 = vmatpush.bf16.msra.mxu0 %v1398
      %1410 = vmatpush.bf16.msra.mxu0 %v1397
      %1411 = vmatpush.bf16.msra.mxu0 %v1396
      %1412 = vmatpush.bf16.msra.mxu0 %v1395
      %1413 = vmatpush.bf16.msra.mxu0 %v1394
      %1414 = vmatpush.bf16.msra.mxu0 %v1393
      %1415 = vmatpush.bf16.msra.mxu0 %v1392
      %1416 = vmatmul.bf16.gmra.mxu0 %v1339
      %v1417 = vpop.f32.mrf.mxu0
      %v1418 = vadd.f32 0.0, %v1417
      %v1419 = vpop.f32.mrf.mxu0
      %v1420 = vadd.f32 0.0, %v1419
      %1421 = vmatmul.bf16.gmra.mxu0 %v1340
      %v1422 = vpop.f32.mrf.mxu0
      %v1423 = vadd.f32 0.0, %v1422
      %v1424 = vpop.f32.mrf.mxu0
      %v1425 = vadd.f32 0.0, %v1424
      %1426 = vmatmul.bf16.gmra.mxu0 %v1341
      %v1427 = vpop.f32.mrf.mxu0
      %v1428 = vadd.f32 0.0, %v1427
      %v1429 = vpop.f32.mrf.mxu0
      %v1430 = vadd.f32 0.0, %v1429
      %1431 = vmatmul.bf16.gmra.mxu0 %v1342
      %v1432 = vpop.f32.mrf.mxu0
      %v1433 = vadd.f32 0.0, %v1432
      %v1434 = vpop.f32.mrf.mxu0
      %v1435 = vadd.f32 0.0, %v1434
      %1436 = vdwg.mxu0
      %v1437 = vadd.f32 %v1323, %v1418
      %v1438 = vadd.f32 %v1324, %v1420
      %v1439 = vadd.f32 %v1325, %v1423
      %v1440 = vadd.f32 %v1326, %v1425
      %v1441 = vadd.f32 %v1327, %v1428
      %v1442 = vadd.f32 %v1328, %v1430
      %v1443 = vadd.f32 %v1329, %v1433
      %v1444 = vadd.f32 %v1330, %v1435
      %v1445 = vld [vmem:[%s4] sm:$0x1]
      %v1447 = vperm.slane %v1445, 0
      %v1449 = vadd.f32 %v1437, %v1447
      %v1450 = vadd.f32 %v1438, %v1447
      %v1451 = vadd.f32 %v1439, %v1447
      %v1452 = vadd.f32 %v1440, %v1447
      %v1453 = vadd.f32 %v1441, %v1447
      %v1454 = vadd.f32 %v1442, %v1447
      %v1455 = vadd.f32 %v1443, %v1447
      %v1456 = vadd.f32 %v1444, %v1447
      %v1457 = vmax.f32 %v1449, 0.0
      %v1458 = vmax.f32 %v1450, 0.0
      %v1459 = vmax.f32 %v1451, 0.0
      %v1460 = vmax.f32 %v1452, 0.0
      %v1461 = vmax.f32 %v1453, 0.0
      %v1462 = vmax.f32 %v1454, 0.0
      %v1463 = vmax.f32 %v1455, 0.0
      %v1464 = vmax.f32 %v1456, 0.0
      %v1465 = vpack.c.bf16 %v1458, %v1457
      %v1466 = vpack.c.bf16 %v1460, %v1459
      %v1467 = vpack.c.bf16 %v1462, %v1461
      %v1468 = vpack.c.bf16 %v1464, %v1463
      %v1469 = vld [vmem:[%s5] sm:$0xf]
      %v1470 = vld [vmem:[%s5 + $0x4] sm:$0xf]
      %v1471 = vld [vmem:[%s5 + $0x8] sm:$0xf]
      %v1472 = vld [vmem:[%s5 + $0xc] sm:$0xf]
      %v1473 = vld [vmem:[%s5 + $0x10] sm:$0xf]
      %v1474 = vld [vmem:[%s5 + $0x14] sm:$0xf]
      %v1475 = vld [vmem:[%s5 + $0x18] sm:$0xf]
      %v1476 = vld [vmem:[%s5 + $0x1c] sm:$0xf]
      %v1477 = vld [vmem:[%s5 + $0x20] sm:$0xf]
      %v1478 = vld [vmem:[%s5 + $0x24] sm:$0xf]
      %v1479 = vld [vmem:[%s5 + $0x28] sm:$0xf]
      %v1480 = vld [vmem:[%s5 + $0x2c] sm:$0xf]
      %v1481 = vld [vmem:[%s5 + $0x30] sm:$0xf]
      %v1482 = vld [vmem:[%s5 + $0x34] sm:$0xf]
      %v1483 = vld [vmem:[%s5 + $0x38] sm:$0xf]
      %v1484 = vld [vmem:[%s5 + $0x3c] sm:$0xf]
      %v1485 = vld [vmem:[%s6] sm:$0x1]
      %v1487 = vperm.slane %v1485, 0
      %v1505 = vunpack.c.l.b16 %v1469
      %v1506 = vunpack.c.l.b16 %v1470
      %v1507 = vunpack.c.l.b16 %v1471
      %v1508 = vunpack.c.l.b16 %v1472
      %v1509 = vunpack.c.l.b16 %v1473
      %v1510 = vunpack.c.l.b16 %v1474
      %v1511 = vunpack.c.l.b16 %v1475
      %v1512 = vunpack.c.l.b16 %v1476
      %v1513 = vunpack.c.l.b16 %v1477
      %v1514 = vunpack.c.l.b16 %v1478
      %v1515 = vunpack.c.l.b16 %v1479
      %v1516 = vunpack.c.l.b16 %v1480
      %v1517 = vunpack.c.l.b16 %v1481
      %v1518 = vunpack.c.l.b16 %v1482
      %v1519 = vunpack.c.l.b16 %v1483
      %v1520 = vunpack.c.l.b16 %v1484
      %v1521 = vpack.c.b16 %v1506, %v1505
      %v1522 = vpack.c.b16 %v1508, %v1507
      %v1523 = vpack.c.b16 %v1510, %v1509
      %v1524 = vpack.c.b16 %v1512, %v1511
      %v1525 = vpack.c.b16 %v1514, %v1513
      %v1526 = vpack.c.b16 %v1516, %v1515
      %v1527 = vpack.c.b16 %v1518, %v1517
      %v1528 = vpack.c.b16 %v1520, %v1519
      %1537 = vmatpush.bf16.msra.mxu0 %v1528
      %1538 = vmatpush.bf16.msra.mxu0 %v1527
      %1539 = vmatpush.bf16.msra.mxu0 %v1526
      %1540 = vmatpush.bf16.msra.mxu0 %v1525
      %1541 = vmatpush.bf16.msra.mxu0 %v1524
      %1542 = vmatpush.bf16.msra.mxu0 %v1523
      %1543 = vmatpush.bf16.msra.mxu0 %v1522
      %1544 = vmatpush.bf16.msra.mxu0 %v1521
      %1545 = vmatmul.bf16.gmra.mxu0 %v1465
      %v1546 = vpop.f32.mrf.mxu0
      %v1547 = vadd.f32 %v1487, %v1546
      %v1548 = vpop.f32.mrf.mxu0
      %v1549 = vadd.f32 %v1487, %v1548
      %1550 = vmatmul.bf16.gmra.mxu0 %v1466
      %v1551 = vpop.f32.mrf.mxu0
      %v1552 = vadd.f32 %v1487, %v1551
      %v1553 = vpop.f32.mrf.mxu0
      %v1554 = vadd.f32 %v1487, %v1553
      %1555 = vmatmul.bf16.gmra.mxu0 %v1467
      %v1556 = vpop.f32.mrf.mxu0
      %v1557 = vadd.f32 %v1487, %v1556
      %v1558 = vpop.f32.mrf.mxu0
      %v1559 = vadd.f32 %v1487, %v1558
      %1560 = vmatmul.bf16.gmra.mxu0 %v1468
      %v1561 = vpop.f32.mrf.mxu0
      %v1562 = vadd.f32 %v1487, %v1561
      %v1563 = vpop.f32.mrf.mxu0
      %v1564 = vadd.f32 %v1487, %v1563
      %1565 = vdwg.mxu0
      %v1566 = vadd.f32 %v1547, %v279
      %v1567 = vadd.f32 %v1549, %v280
      %v1568 = vadd.f32 %v1552, %v281
      %v1569 = vadd.f32 %v1554, %v282
      %v1570 = vadd.f32 %v1557, %v283
      %v1571 = vadd.f32 %v1559, %v284
      %v1572 = vadd.f32 %v1562, %v285
      %v1573 = vadd.f32 %v1564, %v286
      %v1574 = vmax.f32 %v1566, 0.0
      %v1575 = vmax.f32 %v1567, 0.0
      %v1576 = vmax.f32 %v1568, 0.0
      %v1577 = vmax.f32 %v1569, 0.0
      %v1578 = vmax.f32 %v1570, 0.0
      %v1579 = vmax.f32 %v1571, 0.0
      %v1580 = vmax.f32 %v1572, 0.0
      %v1581 = vmax.f32 %v1573, 0.0
      %1582 = vst [vmem:[%s278] sm:$0xff] %v1574
      %1583 = vst [vmem:[%s278 + $0x8] sm:$0xff] %v1575
      %1584 = vst [vmem:[%s278 + $0x10] sm:$0xff] %v1576
      %1585 = vst [vmem:[%s278 + $0x18] sm:$0xff] %v1577
      %1586 = vst [vmem:[%s278 + $0x20] sm:$0xff] %v1578
      %1587 = vst [vmem:[%s278 + $0x28] sm:$0xff] %v1579
      %1588 = vst [vmem:[%s278 + $0x30] sm:$0xff] %v1580
      %1589 = vst [vmem:[%s278 + $0x38] sm:$0xff] %v1581
      %p1590 = scmp.lt.s32.totalorder %s18, 1
      %s1591 = scalar_select %p1590, %s18, 1
      %s1592 = smul.addr %s1591, 8
      %s1593 = smul.addr %s1592, 8
      %s1594 = scalar_lea.vmem %s7, %s1593
      // Predicated region
      $region49: #{bottleneck_forward.1} parent=47 // pred_check
        %p1595 = pneg %p188
      $region50: #{bottleneck_forward.1} parent=47 // pred_check_branch
        %1597 = sbr.rel (%p1595) target = $region52
      $region51: #{bottleneck_forward.1} parent=47 // pred_region
        _
      $region52: #{bottleneck_forward.1} parent=47 // pred_fallthru
        _
    $region48: #{bottleneck_forward.1} parent=5 // pred_fallthru
      _
    %p1598 = scmp.le.s32.totalorder 2, %s13
    // Predicated region
    $region53: #{bottleneck_forward.1} parent=5 // pred_check
      %p1599 = pneg %p1598
    $region54: #{bottleneck_forward.1} parent=5 // pred_check_branch
      %1601 = sbr.rel (%p1599) target = $region56
    $region55: #{bottleneck_forward.1} parent=5 // pred_region
      %s1602 = ssub.s32 %s13, 2
      // Predicated region
      $region57: #{bottleneck_forward.1} parent=55 // pred_check
        %p1603 = pneg %p194
      $region58: #{bottleneck_forward.1} parent=55 // pred_check_branch
        %1605 = sbr.rel (%p1603) target = $region60
      $region59: #{bottleneck_forward.1} parent=55 // pred_region
        %p1606 = scmp.lt.s32.totalorder %s19, 1
        %s1607 = scalar_select %p1606, %s19, 1
        %s1608 = smul.addr %s1607, 8
        %s1609 = smul.addr %s1608, 8
        %s1610 = scalar_lea.vmem %s7, %s1609
      $region60: #{bottleneck_forward.1} parent=55 // pred_fallthru
        _
    $region56: #{bottleneck_forward.1} parent=5 // pred_fallthru
      _
  $region6: #{bottleneck_forward.1} parent=0 // loop_footer
    %s17 = sadd.s32 1, %s13
  $region7: #{bottleneck_forward.1} parent=0 // loop_footer_branch
    %12 = sbr.rel target = $region3
  $region8: #{bottleneck_forward.1} parent=0 // loop_exit
    _

</llo_original>
